<compile_context>
chip_gen: v7x
topology: tpu7x:2x2x1
jax: 0.10.0
libtpu: 0.0.40
codegen_flags: <defaults>
</compile_context>

<pallas_src>
import jax
import jax.numpy as jnp
from jax.experimental import pallas as pl
from jax.experimental.pallas import tpu as pltpu


def _round_up(x, m):
    return (x + m - 1) // m * m


def edge_inference_kernel(src_ref, dst_ref, w_ref, b1_ref, w2_ref, out_ref):
    """One tile of edges: out = relu([src | dst] @ W + b1) @ w2."""
    # Single K=2D MXU matmul (concat folded algebraically into W), f32 accumulation.
    x = jnp.concatenate([src_ref[...], dst_ref[...]], axis=-1)            # (TE, 2D) bf16
    acc = jnp.dot(x, w_ref[...], preferred_element_type=jnp.float32)      # (TE, D)  f32
    h = jnp.maximum(acc + b1_ref[...], 0.0)                               # bias broadcast + ReLU
    # Second Linear(D -> 1, bias=False): bf16 inputs, f32 accumulation.
    out_ref[...] = jnp.dot(h.astype(jnp.bfloat16), w2_ref[...],
                           preferred_element_type=jnp.float32)            # (TE, 1)


def edge_inference_forward(node_repr, src_ids, dst_ids, initial_score, w1, b1, w2, keep_rate,
                           *, tile_e=2048):
    """Pallas implementation of EDGE_INFERENCE over all edges of a batched graph.

    node_repr        : (N, D) node 'short_term_representation'
    src_ids, dst_ids : (E,)   edge endpoint node ids
    initial_score    : (E,)   read by the reference edge_inference but unused (interface parity)
    w1, b1           : nn.Linear(2D, D, bias=True) weight (D, 2D) and bias (D,)
    w2               : nn.Linear(D, 1, bias=False) weight (1, D)
    keep_rate        : stored on the module, does not affect edge scores (ignored)
    Returns interact_score : (E,) float32
    """
    _ = (initial_score, keep_rate)          # not used by the edge computation (matches reference)
    N, D = node_repr.shape
    E = int(src_ids.shape[0])
    assert dst_ids.shape == (E,)
    assert w1.shape == (D, 2 * D) and b1.shape == (D,) and w2.shape == (1, D)

    # edges.src / edges.dst gather (DGL apply_edges batching).  Cast the node table to bf16
    # FIRST so the two streamed (E, D) arrays are bf16 end-to-end: the gather writes half the
    # bytes and the kernel reads half the bytes, with no separate cast/transpose pass.
    node_bf16 = node_repr.astype(jnp.bfloat16)
    src_rep = jnp.take(node_bf16, src_ids, axis=0)       # (E, D) bf16
    dst_rep = jnp.take(node_bf16, dst_ids, axis=0)       # (E, D) bf16

    # Fold cat(s, s-d):  W1 @ cat(s, s-d) = (W1a + W1b) @ s - W1b @ d
    # Edge-major form:   h = relu([s | d] @ [ (W1a+W1b)^T ; -W1b^T ] + b1)
    w1a, w1b = w1[:, :D], w1[:, D:]
    w_cat = jnp.concatenate([(w1a + w1b).T, -w1b.T], axis=0).astype(jnp.bfloat16)  # (2D, D)
    b1_row = b1.astype(jnp.float32).reshape(1, D)
    w2_col = w2.astype(jnp.bfloat16).reshape(D, 1)

    # Tile selection: multiple of 128, capped at 8192 (double-buffered VMEM ~17 MiB worst case),
    # and small enough that the "parallel" grid has >= 2 steps (keeps both v7x TCs busy).
    tile_e = max(128, min(_round_up(int(tile_e), 128), 8192))
    tile_e = min(tile_e, max(128, _round_up(pl.cdiv(E, 2), 128)))
    grid = (pl.cdiv(E, tile_e),)

    cost = pl.CostEstimate(
        flops=2 * E * (2 * D * D + D),
        transcendentals=0,
        bytes_accessed=2 * E * D * 2 + E * 4 + (2 * D * D + 2 * D) * 2,
    )

    score = pl.pallas_call(
        edge_inference_kernel,
        out_shape=jax.ShapeDtypeStruct((E, 1), jnp.float32),
        grid_spec=pltpu.PrefetchScalarGridSpec(
            num_scalar_prefetch=0,
            grid=grid,
            in_specs=[
                pl.BlockSpec((tile_e, D), lambda i: (i, 0)),   # src reps  (streamed, bf16)
                pl.BlockSpec((tile_e, D), lambda i: (i, 0)),   # dst reps  (streamed, bf16)
                pl.BlockSpec((2 * D, D), lambda i: (0, 0)),    # folded W1 (resident)
                pl.BlockSpec((1, D), lambda i: (0, 0)),        # b1 row    (resident)
                pl.BlockSpec((D, 1), lambda i: (0, 0)),        # w2 column (resident)
            ],
            out_specs=pl.BlockSpec((tile_e, 1), lambda i: (i, 0)),
        ),
        compiler_params=pltpu.CompilerParams(
            dimension_semantics=("parallel",),     # shard edge tiles across TensorCores (v7x)
            vmem_limit_bytes=32 * 1024 * 1024,     # explicit budget; safe on v5e/v6e/v7x
        ),
        cost_estimate=cost,
    )(src_rep, dst_rep, w_cat, b1_row, w2_col)
    return score[:, 0]


if __name__ == "__main__":
    D = 128            # embedding_size
    N = 256            # nodes in the batched graph
    E = 2048           # edges in the batched graph

    key = jax.random.PRNGKey(0)
    kf, ks, kd, ki, k1, kb, k2 = jax.random.split(key, 7)
    node_repr = jax.random.normal(kf, (N, D), jnp.float32)          # 'short_term_representation'
    src_ids = jax.random.randint(ks, (E,), 0, N)
    dst_ids = jax.random.randint(kd, (E,), 0, N)
    initial_score = jax.random.uniform(ki, (E,), jnp.float32)       # unused by edge_inference
    # MLP parameters (torch layout): Linear(2D, D, bias=True) then Linear(D, 1, bias=False)
    w1 = jax.random.normal(k1, (D, 2 * D), jnp.float32) / jnp.sqrt(2.0 * D)
    b1 = jax.random.normal(kb, (D,), jnp.float32) * 0.1
    w2 = jax.random.normal(k2, (1, D), jnp.float32) / jnp.sqrt(float(D))
    keep_rate = 0.3

    interact_score = edge_inference_forward(
        node_repr, src_ids, dst_ids, initial_score, w1, b1, w2, keep_rate, tile_e=2048)
    jax.block_until_ready(interact_score)

    # ---- correctness checks ------------------------------------------------------------------
    f32 = jnp.float32
    hi = jax.lax.Precision.HIGHEST

    # (1) exact check of the kernel math on the same bf16-quantized operands it consumes
    sq = jnp.take(node_repr.astype(jnp.bfloat16), src_ids, axis=0).astype(f32)
    dq = jnp.take(node_repr.astype(jnp.bfloat16), dst_ids, axis=0).astype(f32)
    wq = jnp.concatenate([(w1[:, :D] + w1[:, D:]).T, -w1[:, D:].T],
                         axis=0).astype(jnp.bfloat16).astype(f32)
    h_ref = jnp.maximum(
        jnp.dot(jnp.concatenate([sq, dq], axis=-1), wq, precision=hi) + b1[None, :], 0.0)
    ref_kernel = jnp.dot(h_ref.astype(jnp.bfloat16).astype(f32),
                         w2.astype(jnp.bfloat16).astype(f32).T, precision=hi)[:, 0]
    err_k = float(jnp.max(jnp.abs(interact_score - ref_kernel)))
    assert jnp.allclose(interact_score, ref_kernel, atol=5e-3, rtol=5e-3), err_k

    # (2) fidelity to the f32 module formula (bf16 storage -> loose tolerance; scores are O(1))
    src_rep = jnp.take(node_repr, src_ids, axis=0)
    dst_rep = jnp.take(node_repr, dst_ids, axis=0)
    x = jnp.concatenate([src_rep, src_rep - dst_rep], axis=-1)
    ref_module = jnp.dot(
        jnp.maximum(jnp.dot(x, w1.T, precision=hi) + b1[None, :], 0.0), w2.T, precision=hi)[:, 0]
    err_m = float(jnp.max(jnp.abs(interact_score - ref_module)))
    assert err_m < 1e-1, err_m

    print("KERNEL_OK")
</pallas_src>

<mosaic_0001>
module attributes {stable_mosaic.version = 11 : i64} {
  func.func @edge_inference_kernel(%arg0: i32, %arg1: memref<1024x128xbf16, #tpu.memory_space<vmem>>, %arg2: memref<1024x128xbf16, #tpu.memory_space<vmem>>, %arg3: memref<256x128xbf16, #tpu.memory_space<vmem>>, %arg4: memref<1x128xf32, #tpu.memory_space<vmem>>, %arg5: memref<128x1xbf16, #tpu.memory_space<vmem>>, %arg6: memref<1024x1xf32, #tpu.memory_space<vmem>>) attributes {dimension_semantics = [#tpu.dimension_semantics<parallel>], iteration_bounds = array<i64: 2>, scalar_prefetch = 0 : i64, scratch_operands = 0 : i64, tpu.core_type = #tpu.core_type<tc>, window_params = [{transform_indices = @transform_0, window_bounds = array<i64: 1024, 128>}, {transform_indices = @transform_1, window_bounds = array<i64: 1024, 128>}, {pipeline_mode = #tpu.pipeline_mode<synchronous>, transform_indices = @transform_2, window_bounds = array<i64: 256, 128>}, {pipeline_mode = #tpu.pipeline_mode<synchronous>, transform_indices = @transform_3, window_bounds = array<i64: 1, 128>}, {pipeline_mode = #tpu.pipeline_mode<synchronous>, transform_indices = @transform_4, window_bounds = array<i64: 128, 1>}, {transform_indices = @transform_5, window_bounds = array<i64: 1024, 1>}]} {
    %c0 = arith.constant 0 : index
    %c0_0 = arith.constant 0 : index
    %0 = vector.load %arg1[%c0, %c0_0] : memref<1024x128xbf16, #tpu.memory_space<vmem>>, vector<1024x128xbf16>
    %c0_1 = arith.constant 0 : index
    %c0_2 = arith.constant 0 : index
    %1 = vector.load %arg2[%c0_1, %c0_2] : memref<1024x128xbf16, #tpu.memory_space<vmem>>, vector<1024x128xbf16>
    %2 = tpu.concatenate %0, %1 in 1 : vector<1024x128xbf16>, vector<1024x128xbf16> -> vector<1024x256xbf16>
    %c0_3 = arith.constant 0 : index
    %c0_4 = arith.constant 0 : index
    %3 = vector.load %arg3[%c0_3, %c0_4] : memref<256x128xbf16, #tpu.memory_space<vmem>>, vector<256x128xbf16>
    %cst = arith.constant dense<0.000000e+00> : vector<1024x128xf32>
    %4 = tpu.matmul %2, %3, %cst {dimension_numbers = #tpu.dot_dimension_numbers<[1], [0], [0], [1], [0, 0, 1, 1], [], []>} : vector<1024x256xbf16>, vector<256x128xbf16>, vector<1024x128xf32> -> vector<1024x128xf32>
    %c0_5 = arith.constant 0 : index
    %c0_6 = arith.constant 0 : index
    %5 = vector.load %arg4[%c0_5, %c0_6] : memref<1x128xf32, #tpu.memory_space<vmem>>, vector<1x128xf32>
    %6 = vector.broadcast %5 : vector<1x128xf32> to vector<1024x128xf32>
    %7 = arith.addf %4, %6 : vector<1024x128xf32>
    %cst_7 = arith.constant 0.000000e+00 : f32
    %8 = vector.broadcast %cst_7 : f32 to vector<1024x128xf32>
    %9 = arith.maximumf %7, %8 : vector<1024x128xf32>
    %10 = arith.truncf %9 : vector<1024x128xf32> to vector<1024x128xbf16>
    %c0_8 = arith.constant 0 : index
    %c0_9 = arith.constant 0 : index
    %11 = vector.load %arg5[%c0_8, %c0_9] : memref<128x1xbf16, #tpu.memory_space<vmem>>, vector<128x1xbf16>
    %cst_10 = arith.constant dense<0.000000e+00> : vector<1024x1xf32>
    %12 = tpu.matmul %10, %11, %cst_10 {dimension_numbers = #tpu.dot_dimension_numbers<[1], [0], [0], [1], [0, 0, 1, 1], [], []>} : vector<1024x128xbf16>, vector<128x1xbf16>, vector<1024x1xf32> -> vector<1024x1xf32>
    %c0_11 = arith.constant 0 : index
    %c0_12 = arith.constant 0 : index
    %13 = vector.load %arg6[%c0_11, %c0_12] : memref<1024x1xf32, #tpu.memory_space<vmem>>, vector<1024x1xf32>
    tpu.vector_store %arg6[%c0_11, %c0_12], %12 {strides = array<i32>} : memref<1024x1xf32, #tpu.memory_space<vmem>>, vector<1024x1xf32>,
    return
  }
  func.func @transform_0(%arg0: i32) -> (i32, i32) {
    %c0_i32 = arith.constant 0 : i32
    %c0_i32_0 = arith.constant 0 : i32
    return %arg0, %c0_i32 : i32, i32
  }
  func.func @transform_1(%arg0: i32) -> (i32, i32) {
    %c0_i32 = arith.constant 0 : i32
    %c0_i32_0 = arith.constant 0 : i32
    return %arg0, %c0_i32 : i32, i32
  }
  func.func @transform_2(%arg0: i32) -> (i32, i32) {
    %c0_i32 = arith.constant 0 : i32
    %c0_i32_0 = arith.constant 0 : i32
    %c0_i32_1 = arith.constant 0 : i32
    return %c0_i32, %c0_i32_0 : i32, i32
  }
  func.func @transform_3(%arg0: i32) -> (i32, i32) {
    %c0_i32 = arith.constant 0 : i32
    %c0_i32_0 = arith.constant 0 : i32
    %c0_i32_1 = arith.constant 0 : i32
    return %c0_i32, %c0_i32_0 : i32, i32
  }
  func.func @transform_4(%arg0: i32) -> (i32, i32) {
    %c0_i32 = arith.constant 0 : i32
    %c0_i32_0 = arith.constant 0 : i32
    %c0_i32_1 = arith.constant 0 : i32
    return %c0_i32, %c0_i32_0 : i32, i32
  }
  func.func @transform_5(%arg0: i32) -> (i32, i32) {
    %c0_i32 = arith.constant 0 : i32
    %c0_i32_0 = arith.constant 0 : i32
    return %arg0, %c0_i32 : i32, i32
  }
}

</mosaic_0001>

<llo_original>
// kernel: tpu_custom_call.1
$region0: #{tpu_custom_call.1}
  #allocation0 [shape = 'u32[]', space=smem, size = 0x4, offset = 0x4, fixed_abs, tag = 'smem constant byte address 0x4 - core index']
  #allocation1 [shape = 'u32[144,128]{1,0:T(1,128)}', space=vmem, size = 0x12000, scoped, tag = 'internal scratch']
  %s0 = inlined_call_operand.hbm [shape: bf16[2048,128], index: 0, kind: input, shape index: {}]
  %s1 = inlined_call_operand.hbm [shape: bf16[2048,128], index: 1, kind: input, shape index: {}]
  %s2 = inlined_call_operand.hbm [shape: bf16[256,128], index: 2, kind: input, shape index: {}]
  %s3 = inlined_call_operand.vmem [shape: f32[1,128], index: 3, kind: input, shape index: {}]
  %s4 = inlined_call_operand.vmem [shape: bf16[128,1], index: 4, kind: input, shape index: {}]
  %s5 = inlined_call_operand.vmem [shape: f32[2048,1], index: 5, kind: output, shape index: {}]
  %s6 = sld [smem:[#allocation0]]
  $region65: #{tpu_custom_call.1} parent=0
    _
  %s8 = ssub.s32 1, %s6
  %s9 = scalar_select 0, %s8, %s6
  $region1: #{tpu_custom_call.1} parent=0
    #allocation2 [shape = 'u8[524288]{0}', space=vmem, size = 0x80000, scoped, tag = 'input window, operand 0']
    #allocation3 [shape = 's32[2]{0}', space=sflag, size = 0x8, scoped, tag = 'scoped memory for tpu_custom_call.1']
    #allocation4 [shape = 'u8[524288]{0}', space=vmem, size = 0x80000, scoped, tag = 'input window, operand 1']
    #allocation5 [shape = 's32[2]{0}', space=sflag, size = 0x8, scoped, tag = 'scoped memory for tpu_custom_call.1']
    #allocation6 [shape = 'u8[65536]{0}', space=vmem, size = 0x10000, scoped, tag = 'input window, operand 2, single buffered']
    %10 = vsyncpa [#allocation3], 0
    %s11 = scalar_lea.sflag [#allocation3], 1
    %12 = vsyncpa %s11, 0
    %13 = vsyncpa [#allocation5], 0
    %s14 = scalar_lea.sflag [#allocation5], 1
    %15 = vsyncpa %s14, 0
    loop: start=0, step=1, limit=4
    $region2: #{tpu_custom_call.1} parent=1 // loop_pre_header
      _
    $region3: #{tpu_custom_call.1} parent=1 // loop_header
      %s17 = sphi 0, %s21
      %p18 = scmp.ge.s32.totalorder %s17, 4
      %s27 = sphi 0, %s29
      %s30 = sphi 0, %s27
      %s31 = sphi 0, %s30
      %s47 = sphi 0, %s31
      %s53 = sphi 0, %s55
      %s56 = sphi 0, %s53
      %s57 = sphi 0, %s56
      %s73 = sphi 0, %s57
      %s77 = sphi 0, %s77
      %s79 = sphi 0, %s77
      %s80 = sphi 0, %s79
      %s94 = sphi 0, %s80
      %s98 = sphi 0, %s98
      %s100 = sphi 0, %s98
      %s101 = sphi 0, %s100
      %s115 = sphi 0, %s101
      %s119 = sphi 0, %s119
      %s121 = sphi 0, %s119
      %s122 = sphi 0, %s121
      %s136 = sphi 0, %s122
      %s142 = sphi 0, %s144
      %s145 = sphi 0, %s142
      %s146 = sphi 0, %s145
      %s162 = sphi 0, %s146
    $region4: #{tpu_custom_call.1} parent=1 // loop_header_branch
      %20 = sbr.rel (%p18) target = $region8
    $region5: #{tpu_custom_call.1} parent=1 // loop_body
      %s22 = ssub.s32 %s17, 1
      %s23 = ssub.s32 %s17, 2
      %s24 = sadd.s32 %s17, 1
      %s25 = ssub.s32 %s17, %s24
      %p26 = scmp.eq.s32.totalorder %s25, 0
      %s28 = sadd.s32 %s27, 1
      %s29 = scalar_select %p26, %s27, %s28
      %p32 = pneg %p26
      %p33 = scmp.eq.s32.totalorder %s17, 1
      %p34 = por %p32, %p33
      %p35 = scmp.ne.s32.totalorder %s27, %s30
      %p36 = scmp.eq.s32.totalorder %s17, 0
      %p37 = por %p35, %p36
      %p38 = scmp.ne.s32.totalorder %s27, %s30
      %p39 = scmp.eq.s32.totalorder %s22, 1
      %p40 = por %p38, %p39
      %p41 = scmp.ne.s32.totalorder %s30, %s31
      %p42 = scmp.eq.s32.totalorder %s22, 0
      %p43 = por %p41, %p42
      %p44 = scmp.ne.s32.totalorder %s30, %s31
      %p45 = scmp.eq.s32.totalorder %s23, 1
      %p46 = por %p44, %p45
      %p48 = scmp.ne.s32.totalorder %s31, %s47
      %p49 = scmp.eq.s32.totalorder %s23, 0
      %p50 = por %p48, %p49
      %s51 = ssub.s32 %s17, %s24
      %p52 = scmp.eq.s32.totalorder %s51, 0
      %s54 = sadd.s32 %s53, 1
      %s55 = scalar_select %p52, %s53, %s54
      %p58 = pneg %p52
      %p59 = scmp.eq.s32.totalorder %s17, 1
      %p60 = por %p58, %p59
      %p61 = scmp.ne.s32.totalorder %s53, %s56
      %p62 = scmp.eq.s32.totalorder %s17, 0
      %p63 = por %p61, %p62
      %p64 = scmp.ne.s32.totalorder %s53, %s56
      %p65 = scmp.eq.s32.totalorder %s22, 1
      %p66 = por %p64, %p65
      %p67 = scmp.ne.s32.totalorder %s56, %s57
      %p68 = scmp.eq.s32.totalorder %s22, 0
      %p69 = por %p67, %p68
      %p70 = scmp.ne.s32.totalorder %s56, %s57
      %p71 = scmp.eq.s32.totalorder %s23, 1
      %p72 = por %p70, %p71
      %p74 = scmp.ne.s32.totalorder %s57, %s73
      %p75 = scmp.eq.s32.totalorder %s23, 0
      %p76 = por %p74, %p75
      %s78 = sadd.s32 %s77, 1
      %p81 = scmp.eq.s32.totalorder %s17, 1
      %p82 = scmp.ne.s32.totalorder %s77, %s79
      %p83 = scmp.eq.s32.totalorder %s17, 0
      %p84 = por %p82, %p83
      %p85 = scmp.ne.s32.totalorder %s77, %s79
      %p86 = scmp.eq.s32.totalorder %s22, 1
      %p87 = por %p85, %p86
      %p88 = scmp.ne.s32.totalorder %s79, %s80
      %p89 = scmp.eq.s32.totalorder %s22, 0
      %p90 = por %p88, %p89
      %p91 = scmp.ne.s32.totalorder %s79, %s80
      %p92 = scmp.eq.s32.totalorder %s23, 1
      %p93 = por %p91, %p92
      %p95 = scmp.ne.s32.totalorder %s80, %s94
      %p96 = scmp.eq.s32.totalorder %s23, 0
      %p97 = por %p95, %p96
      %s99 = sadd.s32 %s98, 1
      %p102 = scmp.eq.s32.totalorder %s17, 1
      %p103 = scmp.ne.s32.totalorder %s98, %s100
      %p104 = scmp.eq.s32.totalorder %s17, 0
      %p105 = por %p103, %p104
      %p106 = scmp.ne.s32.totalorder %s98, %s100
      %p107 = scmp.eq.s32.totalorder %s22, 1
      %p108 = por %p106, %p107
      %p109 = scmp.ne.s32.totalorder %s100, %s101
      %p110 = scmp.eq.s32.totalorder %s22, 0
      %p111 = por %p109, %p110
      %p112 = scmp.ne.s32.totalorder %s100, %s101
      %p113 = scmp.eq.s32.totalorder %s23, 1
      %p114 = por %p112, %p113
      %p116 = scmp.ne.s32.totalorder %s101, %s115
      %p117 = scmp.eq.s32.totalorder %s23, 0
      %p118 = por %p116, %p117
      %s120 = sadd.s32 %s119, 1
      %p123 = scmp.eq.s32.totalorder %s17, 1
      %p124 = scmp.ne.s32.totalorder %s119, %s121
      %p125 = scmp.eq.s32.totalorder %s17, 0
      %p126 = por %p124, %p125
      %p127 = scmp.ne.s32.totalorder %s119, %s121
      %p128 = scmp.eq.s32.totalorder %s22, 1
      %p129 = por %p127, %p128
      %p130 = scmp.ne.s32.totalorder %s121, %s122
      %p131 = scmp.eq.s32.totalorder %s22, 0
      %p132 = por %p130, %p131
      %p133 = scmp.ne.s32.totalorder %s121, %s122
      %p134 = scmp.eq.s32.totalorder %s23, 1
      %p135 = por %p133, %p134
      %p137 = scmp.ne.s32.totalorder %s122, %s136
      %p138 = scmp.eq.s32.totalorder %s23, 0
      %p139 = por %p137, %p138
      %s140 = ssub.s32 %s17, %s24
      %p141 = scmp.eq.s32.totalorder %s140, 0
      %s143 = sadd.s32 %s142, 1
      %s144 = scalar_select %p141, %s142, %s143
      %p147 = pneg %p141
      %p148 = scmp.eq.s32.totalorder %s17, 1
      %p149 = por %p147, %p148
      %p150 = scmp.ne.s32.totalorder %s142, %s145
      %p151 = scmp.eq.s32.totalorder %s17, 0
      %p152 = por %p150, %p151
      %p153 = scmp.ne.s32.totalorder %s142, %s145
      %p154 = scmp.eq.s32.totalorder %s22, 1
      %p155 = por %p153, %p154
      %p156 = scmp.ne.s32.totalorder %s145, %s146
      %p157 = scmp.eq.s32.totalorder %s22, 0
      %p158 = por %p156, %p157
      %p159 = scmp.ne.s32.totalorder %s145, %s146
      %p160 = scmp.eq.s32.totalorder %s23, 1
      %p161 = por %p159, %p160
      %p163 = scmp.ne.s32.totalorder %s146, %s162
      %p164 = scmp.eq.s32.totalorder %s23, 0
      %p165 = por %p163, %p164
      %p166 = scmp.le.s32.totalorder 1, %s17
      %p167 = scmp.lt.s32.totalorder %s17, 3
      %p168 = pnand %p166, %p167
      %p169 = pneg %p168
      // Predicated region
      $region9: #{tpu_custom_call.1} parent=5 // pred_check
        _
      $region10: #{tpu_custom_call.1} parent=5 // pred_check_branch
        %171 = sbr.rel (%p168) target = $region12
      $region11: #{tpu_custom_call.1} parent=5 // pred_region
        %s172 = ssub.s32 %s17, 1
        // Predicated region
        $region13: #{tpu_custom_call.1} parent=11 // pred_check
          %p173 = pneg %p90
        $region14: #{tpu_custom_call.1} parent=11 // pred_check_branch
          %175 = sbr.rel (%p173) target = $region16
        $region15: #{tpu_custom_call.1} parent=11 // pred_region
          %s177 = ssub.s32 2048, 2048
          %178 = vsyncadd [#allocation5], %s177
          %s179 = sshll.u32 [#allocation6], 4
          %s180 = int_to_ptr.vmem [resolvable:$true] %s179
          %185 = dma.hbm_to_vmem [thread:$0]  %s2, 2048, %s180, [#allocation5], 64, 64, 4
        $region16: #{tpu_custom_call.1} parent=11 // pred_fallthru
          _
        // Predicated region
        $region17: #{tpu_custom_call.1} parent=11 // pred_check
          %p186 = pneg %p111
        $region18: #{tpu_custom_call.1} parent=11 // pred_check_branch
          %188 = sbr.rel (%p186) target = $region20
        $region19: #{tpu_custom_call.1} parent=11 // pred_region
          _
        $region20: #{tpu_custom_call.1} parent=11 // pred_fallthru
          _
        // Predicated region
        $region21: #{tpu_custom_call.1} parent=11 // pred_check
          %p189 = pneg %p132
        $region22: #{tpu_custom_call.1} parent=11 // pred_check_branch
          %191 = sbr.rel (%p189) target = $region24
        $region23: #{tpu_custom_call.1} parent=11 // pred_region
          _
        $region24: #{tpu_custom_call.1} parent=11 // pred_fallthru
          _
      $region12: #{tpu_custom_call.1} parent=5 // pred_fallthru
        _
      %p192 = scmp.lt.s32.totalorder %s17, 2
      // Predicated region
      $region25: #{tpu_custom_call.1} parent=5 // pred_check
        %p193 = pneg %p192
      $region26: #{tpu_custom_call.1} parent=5 // pred_check_branch
        %195 = sbr.rel (%p193) target = $region28
      $region27: #{tpu_custom_call.1} parent=5 // pred_region
        // Predicated region
        $region29: #{tpu_custom_call.1} parent=27 // pred_check
          %p196 = pneg %p37
        $region30: #{tpu_custom_call.1} parent=27 // pred_check_branch
          %198 = sbr.rel (%p196) target = $region32
        $region31: #{tpu_custom_call.1} parent=27 // pred_region
          %s199 = sand.u32 %s27, 1
          %s200 = scalar_lea.sflag [#allocation3], %s199
          %s201 = sand.u32 %s27, 1
          %s202 = smul.addr %s201, 512
          %s203 = scalar_lea.vmem [#allocation2], %s202
          %s204 = smul.u32 128, %s17
          %s206 = ssub.s32 8192, 8192
          %207 = vsyncadd %s200, %s206
          %s208 = smul.addr %s204, 64
          %s209 = scalar_lea.hbm %s0, %s208
          %s210 = sshll.u32 %s203, 4
          %s211 = int_to_ptr.vmem [resolvable:$true] %s210
          %216 = dma.hbm_to_vmem [thread:$0]  %s209, 8192, %s211, %s200, 64, 64, 4
        $region32: #{tpu_custom_call.1} parent=27 // pred_fallthru
          _
        // Predicated region
        $region33: #{tpu_custom_call.1} parent=27 // pred_check
          %p217 = pneg %p63
        $region34: #{tpu_custom_call.1} parent=27 // pred_check_branch
          %219 = sbr.rel (%p217) target = $region36
        $region35: #{tpu_custom_call.1} parent=27 // pred_region
          %s220 = sand.u32 %s17, 1
          %s221 = scalar_lea.sflag [#allocation5], %s220
          %s222 = sand.u32 %s53, 1
          %s223 = smul.addr %s222, 512
          %s224 = scalar_lea.vmem [#allocation4], %s223
          %s225 = smul.u32 128, %s17
          %s227 = ssub.s32 8192, 8192
          %228 = vsyncadd %s221, %s227
          %s229 = smul.addr %s225, 64
          %s230 = scalar_lea.hbm %s1, %s229
          %s231 = sshll.u32 %s224, 4
          %s232 = int_to_ptr.vmem [resolvable:$true] %s231
          %237 = dma.hbm_to_vmem [thread:$0]  %s230, 8192, %s232, %s221, 64, 64, 4
        $region36: #{tpu_custom_call.1} parent=27 // pred_fallthru
          _
      $region28: #{tpu_custom_call.1} parent=5 // pred_fallthru
        _
      %p238 = scmp.le.s32.totalorder 1, %s17
      %p239 = scmp.lt.s32.totalorder %s17, 3
      %p240 = pnand %p238, %p239
      %p241 = pneg %p240
      // Predicated region
      $region37: #{tpu_custom_call.1} parent=5 // pred_check
        _
      $region38: #{tpu_custom_call.1} parent=5 // pred_check_branch
        %243 = sbr.rel (%p240) target = $region40
      $region39: #{tpu_custom_call.1} parent=5 // pred_region
        %s244 = ssub.s32 %s17, 1
        %s245 = sand.u32 %s30, 1
        %s246 = scalar_lea.sflag [#allocation3], %s245
        %s247 = sand.u32 %s30, 1
        %s248 = smul.addr %s247, 512
        %s249 = scalar_lea.vmem [#allocation2], %s248
        // Predicated region
        $region41: #{tpu_custom_call.1} parent=39 // pred_check
          %p250 = pneg %p43
        $region42: #{tpu_custom_call.1} parent=39 // pred_check_branch
          %252 = sbr.rel (%p250) target = $region44
        $region43: #{tpu_custom_call.1} parent=39 // pred_region
          %253 = dma.done %s246, 8192
        $region44: #{tpu_custom_call.1} parent=39 // pred_fallthru
          _
        %s254 = sand.u32 %s22, 1
        %s255 = scalar_lea.sflag [#allocation5], %s254
        %s256 = sand.u32 %s56, 1
        %s257 = smul.addr %s256, 512
        %s258 = scalar_lea.vmem [#allocation4], %s257
        // Predicated region
        $region45: #{tpu_custom_call.1} parent=39 // pred_check
          %p259 = pneg %p69
        $region46: #{tpu_custom_call.1} parent=39 // pred_check_branch
          %261 = sbr.rel (%p259) target = $region48
        $region47: #{tpu_custom_call.1} parent=39 // pred_region
          %262 = dma.done %s255, 8192
        $region48: #{tpu_custom_call.1} parent=39 // pred_fallthru
          _
        // Predicated region
        $region49: #{tpu_custom_call.1} parent=39 // pred_check
          %p263 = pneg %p90
        $region50: #{tpu_custom_call.1} parent=39 // pred_check_branch
          %265 = sbr.rel (%p263) target = $region52
        $region51: #{tpu_custom_call.1} parent=39 // pred_region
          %266 = dma.done [#allocation5], 2048
        $region52: #{tpu_custom_call.1} parent=39 // pred_fallthru
          _
        %s267 = sand.u32 %s30, 1
        %s268 = scalar_lea.sflag [#allocation3], %s267
        %s269 = sand.u32 %s30, 1
        %s270 = smul.addr %s269, 512
        %s271 = scalar_lea.vmem [#allocation2], %s270
        %p272 = pneg %p43
        %p273 = pneg %p40
        %s274 = sand.u32 %s22, 1
        %s275 = scalar_lea.sflag [#allocation5], %s274
        %s276 = sand.u32 %s56, 1
        %s277 = smul.addr %s276, 512
        %s278 = scalar_lea.vmem [#allocation4], %s277
        %p279 = pneg %p69
        %p280 = pneg %p66
        %p281 = pneg %p90
        %p282 = pneg %p87
        %p283 = pneg %p111
        %p284 = pneg %p108
        %p285 = pneg %p132
        %p286 = pneg %p129
        %p287 = pneg %p158
        %p288 = pneg %p155
        %s289 = smul.u32 128, %s22
        %p290 = scmp.lt.s32.totalorder %s289, 255
        %s291 = scalar_select %p290, %s289, 255
        %s292 = smul.addr %s291, 8
        %s293 = scalar_lea.vmem %s5, %s292
        %s294 = smul.u32 128, %s22
        %s295 = smul.u32 128, %s22
        %s296 = smul.u32 128, %s22
        %p297 = scmp.lt.s32.totalorder %s296, 255
        %s298 = scalar_select %p297, %s296, 255
        %s299 = smul.addr %s298, 8
        %s300 = scalar_lea.vmem %s5, %s299
        %s301 = smul.u32 128, %s22
        %v303 = vld [vmem:[%s249] sm:$0xf]
        %v304 = vld [vmem:[%s249 + $0x4] sm:$0xf]
        %v305 = vld [vmem:[%s249 + $0x8] sm:$0xf]
        %v306 = vld [vmem:[%s249 + $0xc] sm:$0xf]
        %v307 = vld [vmem:[%s249 + $0x10] sm:$0xf]
        %v308 = vld [vmem:[%s249 + $0x14] sm:$0xf]
        %v309 = vld [vmem:[%s249 + $0x18] sm:$0xf]
        %v310 = vld [vmem:[%s249 + $0x1c] sm:$0xf]
        %v311 = vld [vmem:[%s249 + $0x20] sm:$0xf]
        %v312 = vld [vmem:[%s249 + $0x24] sm:$0xf]
        %v313 = vld [vmem:[%s249 + $0x28] sm:$0xf]
        %v314 = vld [vmem:[%s249 + $0x2c] sm:$0xf]
        %v315 = vld [vmem:[%s249 + $0x30] sm:$0xf]
        %v316 = vld [vmem:[%s249 + $0x34] sm:$0xf]
        %v317 = vld [vmem:[%s249 + $0x38] sm:$0xf]
        %v318 = vld [vmem:[%s249 + $0x3c] sm:$0xf]
        %v319 = vld [vmem:[%s249 + $0x40] sm:$0xf]
        %v320 = vld [vmem:[%s249 + $0x44] sm:$0xf]
        %v321 = vld [vmem:[%s249 + $0x48] sm:$0xf]
        %v322 = vld [vmem:[%s249 + $0x4c] sm:$0xf]
        %v323 = vld [vmem:[%s249 + $0x50] sm:$0xf]
        %v324 = vld [vmem:[%s249 + $0x54] sm:$0xf]
        %v325 = vld [vmem:[%s249 + $0x58] sm:$0xf]
        %v326 = vld [vmem:[%s249 + $0x5c] sm:$0xf]
        %v327 = vld [vmem:[%s249 + $0x60] sm:$0xf]
        %v328 = vld [vmem:[%s249 + $0x64] sm:$0xf]
        %v329 = vld [vmem:[%s249 + $0x68] sm:$0xf]
        %v330 = vld [vmem:[%s249 + $0x6c] sm:$0xf]
        %v331 = vld [vmem:[%s249 + $0x70] sm:$0xf]
        %v332 = vld [vmem:[%s249 + $0x74] sm:$0xf]
        %v333 = vld [vmem:[%s249 + $0x78] sm:$0xf]
        %v334 = vld [vmem:[%s249 + $0x7c] sm:$0xf]
        %v335 = vld [vmem:[%s249 + $0x80] sm:$0xf]
        %v336 = vld [vmem:[%s249 + $0x84] sm:$0xf]
        %v337 = vld [vmem:[%s249 + $0x88] sm:$0xf]
        %v338 = vld [vmem:[%s249 + $0x8c] sm:$0xf]
        %v339 = vld [vmem:[%s249 + $0x90] sm:$0xf]
        %v340 = vld [vmem:[%s249 + $0x94] sm:$0xf]
        %v341 = vld [vmem:[%s249 + $0x98] sm:$0xf]
        %v342 = vld [vmem:[%s249 + $0x9c] sm:$0xf]
        %v343 = vld [vmem:[%s249 + $0xa0] sm:$0xf]
        %v344 = vld [vmem:[%s249 + $0xa4] sm:$0xf]
        %v345 = vld [vmem:[%s249 + $0xa8] sm:$0xf]
        %v346 = vld [vmem:[%s249 + $0xac] sm:$0xf]
        %v347 = vld [vmem:[%s249 + $0xb0] sm:$0xf]
        %v348 = vld [vmem:[%s249 + $0xb4] sm:$0xf]
        %v349 = vld [vmem:[%s249 + $0xb8] sm:$0xf]
        %v350 = vld [vmem:[%s249 + $0xbc] sm:$0xf]
        %v351 = vld [vmem:[%s249 + $0xc0] sm:$0xf]
        %v352 = vld [vmem:[%s249 + $0xc4] sm:$0xf]
        %v353 = vld [vmem:[%s249 + $0xc8] sm:$0xf]
        %v354 = vld [vmem:[%s249 + $0xcc] sm:$0xf]
        %v355 = vld [vmem:[%s249 + $0xd0] sm:$0xf]
        %v356 = vld [vmem:[%s249 + $0xd4] sm:$0xf]
        %v357 = vld [vmem:[%s249 + $0xd8] sm:$0xf]
        %v358 = vld [vmem:[%s249 + $0xdc] sm:$0xf]
        %v359 = vld [vmem:[%s249 + $0xe0] sm:$0xf]
        %v360 = vld [vmem:[%s249 + $0xe4] sm:$0xf]
        %v361 = vld [vmem:[%s249 + $0xe8] sm:$0xf]
        %v362 = vld [vmem:[%s249 + $0xec] sm:$0xf]
        %v363 = vld [vmem:[%s249 + $0xf0] sm:$0xf]
        %v364 = vld [vmem:[%s249 + $0xf4] sm:$0xf]
        %v365 = vld [vmem:[%s249 + $0xf8] sm:$0xf]
        %v366 = vld [vmem:[%s249 + $0xfc] sm:$0xf]
        %v367 = vld [vmem:[%s249 + $0x100] sm:$0xf]
        %v368 = vld [vmem:[%s249 + $0x104] sm:$0xf]
        %v369 = vld [vmem:[%s249 + $0x108] sm:$0xf]
        %v370 = vld [vmem:[%s249 + $0x10c] sm:$0xf]
        %v371 = vld [vmem:[%s249 + $0x110] sm:$0xf]
        %v372 = vld [vmem:[%s249 + $0x114] sm:$0xf]
        %v373 = vld [vmem:[%s249 + $0x118] sm:$0xf]
        %v374 = vld [vmem:[%s249 + $0x11c] sm:$0xf]
        %v375 = vld [vmem:[%s249 + $0x120] sm:$0xf]
        %v376 = vld [vmem:[%s249 + $0x124] sm:$0xf]
        %v377 = vld [vmem:[%s249 + $0x128] sm:$0xf]
        %v378 = vld [vmem:[%s249 + $0x12c] sm:$0xf]
        %v379 = vld [vmem:[%s249 + $0x130] sm:$0xf]
        %v380 = vld [vmem:[%s249 + $0x134] sm:$0xf]
        %v381 = vld [vmem:[%s249 + $0x138] sm:$0xf]
        %v382 = vld [vmem:[%s249 + $0x13c] sm:$0xf]
        %v383 = vld [vmem:[%s249 + $0x140] sm:$0xf]
        %v384 = vld [vmem:[%s249 + $0x144] sm:$0xf]
        %v385 = vld [vmem:[%s249 + $0x148] sm:$0xf]
        %v386 = vld [vmem:[%s249 + $0x14c] sm:$0xf]
        %v387 = vld [vmem:[%s249 + $0x150] sm:$0xf]
        %v388 = vld [vmem:[%s249 + $0x154] sm:$0xf]
        %v389 = vld [vmem:[%s249 + $0x158] sm:$0xf]
        %v390 = vld [vmem:[%s249 + $0x15c] sm:$0xf]
        %v391 = vld [vmem:[%s249 + $0x160] sm:$0xf]
        %v392 = vld [vmem:[%s249 + $0x164] sm:$0xf]
        %v393 = vld [vmem:[%s249 + $0x168] sm:$0xf]
        %v394 = vld [vmem:[%s249 + $0x16c] sm:$0xf]
        %v395 = vld [vmem:[%s249 + $0x170] sm:$0xf]
        %v396 = vld [vmem:[%s249 + $0x174] sm:$0xf]
        %v397 = vld [vmem:[%s249 + $0x178] sm:$0xf]
        %v398 = vld [vmem:[%s249 + $0x17c] sm:$0xf]
        %v399 = vld [vmem:[%s249 + $0x180] sm:$0xf]
        %v400 = vld [vmem:[%s249 + $0x184] sm:$0xf]
        %v401 = vld [vmem:[%s249 + $0x188] sm:$0xf]
        %v402 = vld [vmem:[%s249 + $0x18c] sm:$0xf]
        %v403 = vld [vmem:[%s249 + $0x190] sm:$0xf]
        %v404 = vld [vmem:[%s249 + $0x194] sm:$0xf]
        %v405 = vld [vmem:[%s249 + $0x198] sm:$0xf]
        %v406 = vld [vmem:[%s249 + $0x19c] sm:$0xf]
        %v407 = vld [vmem:[%s249 + $0x1a0] sm:$0xf]
        %v408 = vld [vmem:[%s249 + $0x1a4] sm:$0xf]
        %v409 = vld [vmem:[%s249 + $0x1a8] sm:$0xf]
        %v410 = vld [vmem:[%s249 + $0x1ac] sm:$0xf]
        %v411 = vld [vmem:[%s249 + $0x1b0] sm:$0xf]
        %v412 = vld [vmem:[%s249 + $0x1b4] sm:$0xf]
        %v413 = vld [vmem:[%s249 + $0x1b8] sm:$0xf]
        %v414 = vld [vmem:[%s249 + $0x1bc] sm:$0xf]
        %v415 = vld [vmem:[%s249 + $0x1c0] sm:$0xf]
        %v416 = vld [vmem:[%s249 + $0x1c4] sm:$0xf]
        %v417 = vld [vmem:[%s249 + $0x1c8] sm:$0xf]
        %v418 = vld [vmem:[%s249 + $0x1cc] sm:$0xf]
        %v419 = vld [vmem:[%s249 + $0x1d0] sm:$0xf]
        %v420 = vld [vmem:[%s249 + $0x1d4] sm:$0xf]
        %v421 = vld [vmem:[%s249 + $0x1d8] sm:$0xf]
        %v422 = vld [vmem:[%s249 + $0x1dc] sm:$0xf]
        %v423 = vld [vmem:[%s249 + $0x1e0] sm:$0xf]
        %v424 = vld [vmem:[%s249 + $0x1e4] sm:$0xf]
        %v425 = vld [vmem:[%s249 + $0x1e8] sm:$0xf]
        %v426 = vld [vmem:[%s249 + $0x1ec] sm:$0xf]
        %v427 = vld [vmem:[%s249 + $0x1f0] sm:$0xf]
        %v428 = vld [vmem:[%s249 + $0x1f4] sm:$0xf]
        %v429 = vld [vmem:[%s249 + $0x1f8] sm:$0xf]
        %v430 = vld [vmem:[%s249 + $0x1fc] sm:$0xf]
        %v431 = vld [vmem:[%s258] sm:$0xf]
        %v432 = vld [vmem:[%s258 + $0x4] sm:$0xf]
        %v433 = vld [vmem:[%s258 + $0x8] sm:$0xf]
        %v434 = vld [vmem:[%s258 + $0xc] sm:$0xf]
        %v435 = vld [vmem:[%s258 + $0x10] sm:$0xf]
        %v436 = vld [vmem:[%s258 + $0x14] sm:$0xf]
        %v437 = vld [vmem:[%s258 + $0x18] sm:$0xf]
        %v438 = vld [vmem:[%s258 + $0x1c] sm:$0xf]
        %v439 = vld [vmem:[%s258 + $0x20] sm:$0xf]
        %v440 = vld [vmem:[%s258 + $0x24] sm:$0xf]
        %v441 = vld [vmem:[%s258 + $0x28] sm:$0xf]
        %v442 = vld [vmem:[%s258 + $0x2c] sm:$0xf]
        %v443 = vld [vmem:[%s258 + $0x30] sm:$0xf]
        %v444 = vld [vmem:[%s258 + $0x34] sm:$0xf]
        %v445 = vld [vmem:[%s258 + $0x38] sm:$0xf]
        %v446 = vld [vmem:[%s258 + $0x3c] sm:$0xf]
        %v447 = vld [vmem:[%s258 + $0x40] sm:$0xf]
        %v448 = vld [vmem:[%s258 + $0x44] sm:$0xf]
        %v449 = vld [vmem:[%s258 + $0x48] sm:$0xf]
        %v450 = vld [vmem:[%s258 + $0x4c] sm:$0xf]
        %v451 = vld [vmem:[%s258 + $0x50] sm:$0xf]
        %v452 = vld [vmem:[%s258 + $0x54] sm:$0xf]
        %v453 = vld [vmem:[%s258 + $0x58] sm:$0xf]
        %v454 = vld [vmem:[%s258 + $0x5c] sm:$0xf]
        %v455 = vld [vmem:[%s258 + $0x60] sm:$0xf]
        %v456 = vld [vmem:[%s258 + $0x64] sm:$0xf]
        %v457 = vld [vmem:[%s258 + $0x68] sm:$0xf]
        %v458 = vld [vmem:[%s258 + $0x6c] sm:$0xf]
        %v459 = vld [vmem:[%s258 + $0x70] sm:$0xf]
        %v460 = vld [vmem:[%s258 + $0x74] sm:$0xf]
        %v461 = vld [vmem:[%s258 + $0x78] sm:$0xf]
        %v462 = vld [vmem:[%s258 + $0x7c] sm:$0xf]
        %v463 = vld [vmem:[%s258 + $0x80] sm:$0xf]
        %v464 = vld [vmem:[%s258 + $0x84] sm:$0xf]
        %v465 = vld [vmem:[%s258 + $0x88] sm:$0xf]
        %v466 = vld [vmem:[%s258 + $0x8c] sm:$0xf]
        %v467 = vld [vmem:[%s258 + $0x90] sm:$0xf]
        %v468 = vld [vmem:[%s258 + $0x94] sm:$0xf]
        %v469 = vld [vmem:[%s258 + $0x98] sm:$0xf]
        %v470 = vld [vmem:[%s258 + $0x9c] sm:$0xf]
        %v471 = vld [vmem:[%s258 + $0xa0] sm:$0xf]
        %v472 = vld [vmem:[%s258 + $0xa4] sm:$0xf]
        %v473 = vld [vmem:[%s258 + $0xa8] sm:$0xf]
        %v474 = vld [vmem:[%s258 + $0xac] sm:$0xf]
        %v475 = vld [vmem:[%s258 + $0xb0] sm:$0xf]
        %v476 = vld [vmem:[%s258 + $0xb4] sm:$0xf]
        %v477 = vld [vmem:[%s258 + $0xb8] sm:$0xf]
        %v478 = vld [vmem:[%s258 + $0xbc] sm:$0xf]
        %v479 = vld [vmem:[%s258 + $0xc0] sm:$0xf]
        %v480 = vld [vmem:[%s258 + $0xc4] sm:$0xf]
        %v481 = vld [vmem:[%s258 + $0xc8] sm:$0xf]
        %v482 = vld [vmem:[%s258 + $0xcc] sm:$0xf]
        %v483 = vld [vmem:[%s258 + $0xd0] sm:$0xf]
        %v484 = vld [vmem:[%s258 + $0xd4] sm:$0xf]
        %v485 = vld [vmem:[%s258 + $0xd8] sm:$0xf]
        %v486 = vld [vmem:[%s258 + $0xdc] sm:$0xf]
        %v487 = vld [vmem:[%s258 + $0xe0] sm:$0xf]
        %v488 = vld [vmem:[%s258 + $0xe4] sm:$0xf]
        %v489 = vld [vmem:[%s258 + $0xe8] sm:$0xf]
        %v490 = vld [vmem:[%s258 + $0xec] sm:$0xf]
        %v491 = vld [vmem:[%s258 + $0xf0] sm:$0xf]
        %v492 = vld [vmem:[%s258 + $0xf4] sm:$0xf]
        %v493 = vld [vmem:[%s258 + $0xf8] sm:$0xf]
        %v494 = vld [vmem:[%s258 + $0xfc] sm:$0xf]
        %v495 = vld [vmem:[%s258 + $0x100] sm:$0xf]
        %v496 = vld [vmem:[%s258 + $0x104] sm:$0xf]
        %v497 = vld [vmem:[%s258 + $0x108] sm:$0xf]
        %v498 = vld [vmem:[%s258 + $0x10c] sm:$0xf]
        %v499 = vld [vmem:[%s258 + $0x110] sm:$0xf]
        %v500 = vld [vmem:[%s258 + $0x114] sm:$0xf]
        %v501 = vld [vmem:[%s258 + $0x118] sm:$0xf]
        %v502 = vld [vmem:[%s258 + $0x11c] sm:$0xf]
        %v503 = vld [vmem:[%s258 + $0x120] sm:$0xf]
        %v504 = vld [vmem:[%s258 + $0x124] sm:$0xf]
        %v505 = vld [vmem:[%s258 + $0x128] sm:$0xf]
        %v506 = vld [vmem:[%s258 + $0x12c] sm:$0xf]
        %v507 = vld [vmem:[%s258 + $0x130] sm:$0xf]
        %v508 = vld [vmem:[%s258 + $0x134] sm:$0xf]
        %v509 = vld [vmem:[%s258 + $0x138] sm:$0xf]
        %v510 = vld [vmem:[%s258 + $0x13c] sm:$0xf]
        %v511 = vld [vmem:[%s258 + $0x140] sm:$0xf]
        %v512 = vld [vmem:[%s258 + $0x144] sm:$0xf]
        %v513 = vld [vmem:[%s258 + $0x148] sm:$0xf]
        %v514 = vld [vmem:[%s258 + $0x14c] sm:$0xf]
        %v515 = vld [vmem:[%s258 + $0x150] sm:$0xf]
        %v516 = vld [vmem:[%s258 + $0x154] sm:$0xf]
        %v517 = vld [vmem:[%s258 + $0x158] sm:$0xf]
        %v518 = vld [vmem:[%s258 + $0x15c] sm:$0xf]
        %v519 = vld [vmem:[%s258 + $0x160] sm:$0xf]
        %v520 = vld [vmem:[%s258 + $0x164] sm:$0xf]
        %v521 = vld [vmem:[%s258 + $0x168] sm:$0xf]
        %v522 = vld [vmem:[%s258 + $0x16c] sm:$0xf]
        %v523 = vld [vmem:[%s258 + $0x170] sm:$0xf]
        %v524 = vld [vmem:[%s258 + $0x174] sm:$0xf]
        %v525 = vld [vmem:[%s258 + $0x178] sm:$0xf]
        %v526 = vld [vmem:[%s258 + $0x17c] sm:$0xf]
        %v527 = vld [vmem:[%s258 + $0x180] sm:$0xf]
        %v528 = vld [vmem:[%s258 + $0x184] sm:$0xf]
        %v529 = vld [vmem:[%s258 + $0x188] sm:$0xf]
        %v530 = vld [vmem:[%s258 + $0x18c] sm:$0xf]
        %v531 = vld [vmem:[%s258 + $0x190] sm:$0xf]
        %v532 = vld [vmem:[%s258 + $0x194] sm:$0xf]
        %v533 = vld [vmem:[%s258 + $0x198] sm:$0xf]
        %v534 = vld [vmem:[%s258 + $0x19c] sm:$0xf]
        %v535 = vld [vmem:[%s258 + $0x1a0] sm:$0xf]
        %v536 = vld [vmem:[%s258 + $0x1a4] sm:$0xf]
        %v537 = vld [vmem:[%s258 + $0x1a8] sm:$0xf]
        %v538 = vld [vmem:[%s258 + $0x1ac] sm:$0xf]
        %v539 = vld [vmem:[%s258 + $0x1b0] sm:$0xf]
        %v540 = vld [vmem:[%s258 + $0x1b4] sm:$0xf]
        %v541 = vld [vmem:[%s258 + $0x1b8] sm:$0xf]
        %v542 = vld [vmem:[%s258 + $0x1bc] sm:$0xf]
        %v543 = vld [vmem:[%s258 + $0x1c0] sm:$0xf]
        %v544 = vld [vmem:[%s258 + $0x1c4] sm:$0xf]
        %v545 = vld [vmem:[%s258 + $0x1c8] sm:$0xf]
        %v546 = vld [vmem:[%s258 + $0x1cc] sm:$0xf]
        %v547 = vld [vmem:[%s258 + $0x1d0] sm:$0xf]
        %v548 = vld [vmem:[%s258 + $0x1d4] sm:$0xf]
        %v549 = vld [vmem:[%s258 + $0x1d8] sm:$0xf]
        %v550 = vld [vmem:[%s258 + $0x1dc] sm:$0xf]
        %v551 = vld [vmem:[%s258 + $0x1e0] sm:$0xf]
        %v552 = vld [vmem:[%s258 + $0x1e4] sm:$0xf]
        %v553 = vld [vmem:[%s258 + $0x1e8] sm:$0xf]
        %v554 = vld [vmem:[%s258 + $0x1ec] sm:$0xf]
        %v555 = vld [vmem:[%s258 + $0x1f0] sm:$0xf]
        %v556 = vld [vmem:[%s258 + $0x1f4] sm:$0xf]
        %v557 = vld [vmem:[%s258 + $0x1f8] sm:$0xf]
        %v558 = vld [vmem:[%s258 + $0x1fc] sm:$0xf]
        %v687 = vunpack.c.l.b16 %v303
        %v688 = vunpack.c.l.b16 %v304
        %v689 = vunpack.c.l.b16 %v305
        %v690 = vunpack.c.l.b16 %v306
        %v691 = vunpack.c.l.b16 %v307
        %v692 = vunpack.c.l.b16 %v308
        %v693 = vunpack.c.l.b16 %v309
        %v694 = vunpack.c.l.b16 %v310
        %v695 = vunpack.c.l.b16 %v311
        %v696 = vunpack.c.l.b16 %v312
        %v697 = vunpack.c.l.b16 %v313
        %v698 = vunpack.c.l.b16 %v314
        %v699 = vunpack.c.l.b16 %v315
        %v700 = vunpack.c.l.b16 %v316
        %v701 = vunpack.c.l.b16 %v317
        %v702 = vunpack.c.l.b16 %v318
        %v703 = vunpack.c.l.b16 %v319
        %v704 = vunpack.c.l.b16 %v320
        %v705 = vunpack.c.l.b16 %v321
        %v706 = vunpack.c.l.b16 %v322
        %v707 = vunpack.c.l.b16 %v323
        %v708 = vunpack.c.l.b16 %v324
        %v709 = vunpack.c.l.b16 %v325
        %v710 = vunpack.c.l.b16 %v326
        %v711 = vunpack.c.l.b16 %v327
        %v712 = vunpack.c.l.b16 %v328
        %v713 = vunpack.c.l.b16 %v329
        %v714 = vunpack.c.l.b16 %v330
        %v715 = vunpack.c.l.b16 %v331
        %v716 = vunpack.c.l.b16 %v332
        %v717 = vunpack.c.l.b16 %v333
        %v718 = vunpack.c.l.b16 %v334
        %v719 = vunpack.c.l.b16 %v335
        %v720 = vunpack.c.l.b16 %v336
        %v721 = vunpack.c.l.b16 %v337
        %v722 = vunpack.c.l.b16 %v338
        %v723 = vunpack.c.l.b16 %v339
        %v724 = vunpack.c.l.b16 %v340
        %v725 = vunpack.c.l.b16 %v341
        %v726 = vunpack.c.l.b16 %v342
        %v727 = vunpack.c.l.b16 %v343
        %v728 = vunpack.c.l.b16 %v344
        %v729 = vunpack.c.l.b16 %v345
        %v730 = vunpack.c.l.b16 %v346
        %v731 = vunpack.c.l.b16 %v347
        %v732 = vunpack.c.l.b16 %v348
        %v733 = vunpack.c.l.b16 %v349
        %v734 = vunpack.c.l.b16 %v350
        %v735 = vunpack.c.l.b16 %v351
        %v736 = vunpack.c.l.b16 %v352
        %v737 = vunpack.c.l.b16 %v353
        %v738 = vunpack.c.l.b16 %v354
        %v739 = vunpack.c.l.b16 %v355
        %v740 = vunpack.c.l.b16 %v356
        %v741 = vunpack.c.l.b16 %v357
        %v742 = vunpack.c.l.b16 %v358
        %v743 = vunpack.c.l.b16 %v359
        %v744 = vunpack.c.l.b16 %v360
        %v745 = vunpack.c.l.b16 %v361
        %v746 = vunpack.c.l.b16 %v362
        %v747 = vunpack.c.l.b16 %v363
        %v748 = vunpack.c.l.b16 %v364
        %v749 = vunpack.c.l.b16 %v365
        %v750 = vunpack.c.l.b16 %v366
        %v751 = vunpack.c.l.b16 %v367
        %v752 = vunpack.c.l.b16 %v368
        %v753 = vunpack.c.l.b16 %v369
        %v754 = vunpack.c.l.b16 %v370
        %v755 = vunpack.c.l.b16 %v371
        %v756 = vunpack.c.l.b16 %v372
        %v757 = vunpack.c.l.b16 %v373
        %v758 = vunpack.c.l.b16 %v374
        %v759 = vunpack.c.l.b16 %v375
        %v760 = vunpack.c.l.b16 %v376
        %v761 = vunpack.c.l.b16 %v377
        %v762 = vunpack.c.l.b16 %v378
        %v763 = vunpack.c.l.b16 %v379
        %v764 = vunpack.c.l.b16 %v380
        %v765 = vunpack.c.l.b16 %v381
        %v766 = vunpack.c.l.b16 %v382
        %v767 = vunpack.c.l.b16 %v383
        %v768 = vunpack.c.l.b16 %v384
        %v769 = vunpack.c.l.b16 %v385
        %v770 = vunpack.c.l.b16 %v386
        %v771 = vunpack.c.l.b16 %v387
        %v772 = vunpack.c.l.b16 %v388
        %v773 = vunpack.c.l.b16 %v389
        %v774 = vunpack.c.l.b16 %v390
        %v775 = vunpack.c.l.b16 %v391
        %v776 = vunpack.c.l.b16 %v392
        %v777 = vunpack.c.l.b16 %v393
        %v778 = vunpack.c.l.b16 %v394
        %v779 = vunpack.c.l.b16 %v395
        %v780 = vunpack.c.l.b16 %v396
        %v781 = vunpack.c.l.b16 %v397
        %v782 = vunpack.c.l.b16 %v398
        %v783 = vunpack.c.l.b16 %v399
        %v784 = vunpack.c.l.b16 %v400
        %v785 = vunpack.c.l.b16 %v401
        %v786 = vunpack.c.l.b16 %v402
        %v787 = vunpack.c.l.b16 %v403
        %v788 = vunpack.c.l.b16 %v404
        %v789 = vunpack.c.l.b16 %v405
        %v790 = vunpack.c.l.b16 %v406
        %v791 = vunpack.c.l.b16 %v407
        %v792 = vunpack.c.l.b16 %v408
        %v793 = vunpack.c.l.b16 %v409
        %v794 = vunpack.c.l.b16 %v410
        %v795 = vunpack.c.l.b16 %v411
        %v796 = vunpack.c.l.b16 %v412
        %v797 = vunpack.c.l.b16 %v413
        %v798 = vunpack.c.l.b16 %v414
        %v799 = vunpack.c.l.b16 %v415
        %v800 = vunpack.c.l.b16 %v416
        %v801 = vunpack.c.l.b16 %v417
        %v802 = vunpack.c.l.b16 %v418
        %v803 = vunpack.c.l.b16 %v419
        %v804 = vunpack.c.l.b16 %v420
        %v805 = vunpack.c.l.b16 %v421
        %v806 = vunpack.c.l.b16 %v422
        %v807 = vunpack.c.l.b16 %v423
        %v808 = vunpack.c.l.b16 %v424
        %v809 = vunpack.c.l.b16 %v425
        %v810 = vunpack.c.l.b16 %v426
        %v811 = vunpack.c.l.b16 %v427
        %v812 = vunpack.c.l.b16 %v428
        %v813 = vunpack.c.l.b16 %v429
        %v814 = vunpack.c.l.b16 %v430
        %v815 = vpack.c.b16 %v688, %v687
        %v816 = vpack.c.b16 %v690, %v689
        %v817 = vpack.c.b16 %v692, %v691
        %v818 = vpack.c.b16 %v694, %v693
        %v819 = vpack.c.b16 %v696, %v695
        %v820 = vpack.c.b16 %v698, %v697
        %v821 = vpack.c.b16 %v700, %v699
        %v822 = vpack.c.b16 %v702, %v701
        %v823 = vpack.c.b16 %v704, %v703
        %v824 = vpack.c.b16 %v706, %v705
        %v825 = vpack.c.b16 %v708, %v707
        %v826 = vpack.c.b16 %v710, %v709
        %v827 = vpack.c.b16 %v712, %v711
        %v828 = vpack.c.b16 %v714, %v713
        %v829 = vpack.c.b16 %v716, %v715
        %v830 = vpack.c.b16 %v718, %v717
        %v831 = vpack.c.b16 %v720, %v719
        %v832 = vpack.c.b16 %v722, %v721
        %v833 = vpack.c.b16 %v724, %v723
        %v834 = vpack.c.b16 %v726, %v725
        %v835 = vpack.c.b16 %v728, %v727
        %v836 = vpack.c.b16 %v730, %v729
        %v837 = vpack.c.b16 %v732, %v731
        %v838 = vpack.c.b16 %v734, %v733
        %v839 = vpack.c.b16 %v736, %v735
        %v840 = vpack.c.b16 %v738, %v737
        %v841 = vpack.c.b16 %v740, %v739
        %v842 = vpack.c.b16 %v742, %v741
        %v843 = vpack.c.b16 %v744, %v743
        %v844 = vpack.c.b16 %v746, %v745
        %v845 = vpack.c.b16 %v748, %v747
        %v846 = vpack.c.b16 %v750, %v749
        %v847 = vpack.c.b16 %v752, %v751
        %v848 = vpack.c.b16 %v754, %v753
        %v849 = vpack.c.b16 %v756, %v755
        %v850 = vpack.c.b16 %v758, %v757
        %v851 = vpack.c.b16 %v760, %v759
        %v852 = vpack.c.b16 %v762, %v761
        %v853 = vpack.c.b16 %v764, %v763
        %v854 = vpack.c.b16 %v766, %v765
        %v855 = vpack.c.b16 %v768, %v767
        %v856 = vpack.c.b16 %v770, %v769
        %v857 = vpack.c.b16 %v772, %v771
        %v858 = vpack.c.b16 %v774, %v773
        %v859 = vpack.c.b16 %v776, %v775
        %v860 = vpack.c.b16 %v778, %v777
        %v861 = vpack.c.b16 %v780, %v779
        %v862 = vpack.c.b16 %v782, %v781
        %v863 = vpack.c.b16 %v784, %v783
        %v864 = vpack.c.b16 %v786, %v785
        %v865 = vpack.c.b16 %v788, %v787
        %v866 = vpack.c.b16 %v790, %v789
        %v867 = vpack.c.b16 %v792, %v791
        %v868 = vpack.c.b16 %v794, %v793
        %v869 = vpack.c.b16 %v796, %v795
        %v870 = vpack.c.b16 %v798, %v797
        %v871 = vpack.c.b16 %v800, %v799
        %v872 = vpack.c.b16 %v802, %v801
        %v873 = vpack.c.b16 %v804, %v803
        %v874 = vpack.c.b16 %v806, %v805
        %v875 = vpack.c.b16 %v808, %v807
        %v876 = vpack.c.b16 %v810, %v809
        %v877 = vpack.c.b16 %v812, %v811
        %v878 = vpack.c.b16 %v814, %v813
        %v1071 = vunpack.c.l.b16 %v431
        %v1072 = vunpack.c.l.b16 %v432
        %v1073 = vunpack.c.l.b16 %v433
        %v1074 = vunpack.c.l.b16 %v434
        %v1075 = vunpack.c.l.b16 %v435
        %v1076 = vunpack.c.l.b16 %v436
        %v1077 = vunpack.c.l.b16 %v437
        %v1078 = vunpack.c.l.b16 %v438
        %v1079 = vunpack.c.l.b16 %v439
        %v1080 = vunpack.c.l.b16 %v440
        %v1081 = vunpack.c.l.b16 %v441
        %v1082 = vunpack.c.l.b16 %v442
        %v1083 = vunpack.c.l.b16 %v443
        %v1084 = vunpack.c.l.b16 %v444
        %v1085 = vunpack.c.l.b16 %v445
        %v1086 = vunpack.c.l.b16 %v446
        %v1087 = vunpack.c.l.b16 %v447
        %v1088 = vunpack.c.l.b16 %v448
        %v1089 = vunpack.c.l.b16 %v449
        %v1090 = vunpack.c.l.b16 %v450
        %v1091 = vunpack.c.l.b16 %v451
        %v1092 = vunpack.c.l.b16 %v452
        %v1093 = vunpack.c.l.b16 %v453
        %v1094 = vunpack.c.l.b16 %v454
        %v1095 = vunpack.c.l.b16 %v455
        %v1096 = vunpack.c.l.b16 %v456
        %v1097 = vunpack.c.l.b16 %v457
        %v1098 = vunpack.c.l.b16 %v458
        %v1099 = vunpack.c.l.b16 %v459
        %v1100 = vunpack.c.l.b16 %v460
        %v1101 = vunpack.c.l.b16 %v461
        %v1102 = vunpack.c.l.b16 %v462
        %v1103 = vunpack.c.l.b16 %v463
        %v1104 = vunpack.c.l.b16 %v464
        %v1105 = vunpack.c.l.b16 %v465
        %v1106 = vunpack.c.l.b16 %v466
        %v1107 = vunpack.c.l.b16 %v467
        %v1108 = vunpack.c.l.b16 %v468
        %v1109 = vunpack.c.l.b16 %v469
        %v1110 = vunpack.c.l.b16 %v470
        %v1111 = vunpack.c.l.b16 %v471
        %v1112 = vunpack.c.l.b16 %v472
        %v1113 = vunpack.c.l.b16 %v473
        %v1114 = vunpack.c.l.b16 %v474
        %v1115 = vunpack.c.l.b16 %v475
        %v1116 = vunpack.c.l.b16 %v476
        %v1117 = vunpack.c.l.b16 %v477
        %v1118 = vunpack.c.l.b16 %v478
        %v1119 = vunpack.c.l.b16 %v479
        %v1120 = vunpack.c.l.b16 %v480
        %v1121 = vunpack.c.l.b16 %v481
        %v1122 = vunpack.c.l.b16 %v482
        %v1123 = vunpack.c.l.b16 %v483
        %v1124 = vunpack.c.l.b16 %v484
        %v1125 = vunpack.c.l.b16 %v485
        %v1126 = vunpack.c.l.b16 %v486
        %v1127 = vunpack.c.l.b16 %v487
        %v1128 = vunpack.c.l.b16 %v488
        %v1129 = vunpack.c.l.b16 %v489
        %v1130 = vunpack.c.l.b16 %v490
        %v1131 = vunpack.c.l.b16 %v491
        %v1132 = vunpack.c.l.b16 %v492
        %v1133 = vunpack.c.l.b16 %v493
        %v1134 = vunpack.c.l.b16 %v494
        %v1135 = vunpack.c.l.b16 %v495
        %v1136 = vunpack.c.l.b16 %v496
        %v1137 = vunpack.c.l.b16 %v497
        %v1138 = vunpack.c.l.b16 %v498
        %v1139 = vunpack.c.l.b16 %v499
        %v1140 = vunpack.c.l.b16 %v500
        %v1141 = vunpack.c.l.b16 %v501
        %v1142 = vunpack.c.l.b16 %v502
        %v1143 = vunpack.c.l.b16 %v503
        %v1144 = vunpack.c.l.b16 %v504
        %v1145 = vunpack.c.l.b16 %v505
        %v1146 = vunpack.c.l.b16 %v506
        %v1147 = vunpack.c.l.b16 %v507
        %v1148 = vunpack.c.l.b16 %v508
        %v1149 = vunpack.c.l.b16 %v509
        %v1150 = vunpack.c.l.b16 %v510
        %v1151 = vunpack.c.l.b16 %v511
        %v1152 = vunpack.c.l.b16 %v512
        %v1153 = vunpack.c.l.b16 %v513
        %v1154 = vunpack.c.l.b16 %v514
        %v1155 = vunpack.c.l.b16 %v515
        %v1156 = vunpack.c.l.b16 %v516
        %v1157 = vunpack.c.l.b16 %v517
        %v1158 = vunpack.c.l.b16 %v518
        %v1159 = vunpack.c.l.b16 %v519
        %v1160 = vunpack.c.l.b16 %v520
        %v1161 = vunpack.c.l.b16 %v521
        %v1162 = vunpack.c.l.b16 %v522
        %v1163 = vunpack.c.l.b16 %v523
        %v1164 = vunpack.c.l.b16 %v524
        %v1165 = vunpack.c.l.b16 %v525
        %v1166 = vunpack.c.l.b16 %v526
        %v1167 = vunpack.c.l.b16 %v527
        %v1168 = vunpack.c.l.b16 %v528
        %v1169 = vunpack.c.l.b16 %v529
        %v1170 = vunpack.c.l.b16 %v530
        %v1171 = vunpack.c.l.b16 %v531
        %v1172 = vunpack.c.l.b16 %v532
        %v1173 = vunpack.c.l.b16 %v533
        %v1174 = vunpack.c.l.b16 %v534
        %v1175 = vunpack.c.l.b16 %v535
        %v1176 = vunpack.c.l.b16 %v536
        %v1177 = vunpack.c.l.b16 %v537
        %v1178 = vunpack.c.l.b16 %v538
        %v1179 = vunpack.c.l.b16 %v539
        %v1180 = vunpack.c.l.b16 %v540
        %v1181 = vunpack.c.l.b16 %v541
        %v1182 = vunpack.c.l.b16 %v542
        %v1183 = vunpack.c.l.b16 %v543
        %v1184 = vunpack.c.l.b16 %v544
        %v1185 = vunpack.c.l.b16 %v545
        %v1186 = vunpack.c.l.b16 %v546
        %v1187 = vunpack.c.l.b16 %v547
        %v1188 = vunpack.c.l.b16 %v548
        %v1189 = vunpack.c.l.b16 %v549
        %v1190 = vunpack.c.l.b16 %v550
        %v1191 = vunpack.c.l.b16 %v551
        %v1192 = vunpack.c.l.b16 %v552
        %v1193 = vunpack.c.l.b16 %v553
        %v1194 = vunpack.c.l.b16 %v554
        %v1195 = vunpack.c.l.b16 %v555
        %v1196 = vunpack.c.l.b16 %v556
        %v1197 = vunpack.c.l.b16 %v557
        %v1198 = vunpack.c.l.b16 %v558
        %v1199 = vpack.c.b16 %v1072, %v1071
        %v1200 = vpack.c.b16 %v1074, %v1073
        %v1201 = vpack.c.b16 %v1076, %v1075
        %v1202 = vpack.c.b16 %v1078, %v1077
        %v1203 = vpack.c.b16 %v1080, %v1079
        %v1204 = vpack.c.b16 %v1082, %v1081
        %v1205 = vpack.c.b16 %v1084, %v1083
        %v1206 = vpack.c.b16 %v1086, %v1085
        %v1207 = vpack.c.b16 %v1088, %v1087
        %v1208 = vpack.c.b16 %v1090, %v1089
        %v1209 = vpack.c.b16 %v1092, %v1091
        %v1210 = vpack.c.b16 %v1094, %v1093
        %v1211 = vpack.c.b16 %v1096, %v1095
        %v1212 = vpack.c.b16 %v1098, %v1097
        %v1213 = vpack.c.b16 %v1100, %v1099
        %v1214 = vpack.c.b16 %v1102, %v1101
        %v1215 = vpack.c.b16 %v1104, %v1103
        %v1216 = vpack.c.b16 %v1106, %v1105
        %v1217 = vpack.c.b16 %v1108, %v1107
        %v1218 = vpack.c.b16 %v1110, %v1109
        %v1219 = vpack.c.b16 %v1112, %v1111
        %v1220 = vpack.c.b16 %v1114, %v1113
        %v1221 = vpack.c.b16 %v1116, %v1115
        %v1222 = vpack.c.b16 %v1118, %v1117
        %v1223 = vpack.c.b16 %v1120, %v1119
        %v1224 = vpack.c.b16 %v1122, %v1121
        %v1225 = vpack.c.b16 %v1124, %v1123
        %v1226 = vpack.c.b16 %v1126, %v1125
        %v1227 = vpack.c.b16 %v1128, %v1127
        %v1228 = vpack.c.b16 %v1130, %v1129
        %v1229 = vpack.c.b16 %v1132, %v1131
        %v1230 = vpack.c.b16 %v1134, %v1133
        %v1231 = vpack.c.b16 %v1136, %v1135
        %v1232 = vpack.c.b16 %v1138, %v1137
        %v1233 = vpack.c.b16 %v1140, %v1139
        %v1234 = vpack.c.b16 %v1142, %v1141
        %v1235 = vpack.c.b16 %v1144, %v1143
        %v1236 = vpack.c.b16 %v1146, %v1145
        %v1237 = vpack.c.b16 %v1148, %v1147
        %v1238 = vpack.c.b16 %v1150, %v1149
        %v1239 = vpack.c.b16 %v1152, %v1151
        %v1240 = vpack.c.b16 %v1154, %v1153
        %v1241 = vpack.c.b16 %v1156, %v1155
        %v1242 = vpack.c.b16 %v1158, %v1157
        %v1243 = vpack.c.b16 %v1160, %v1159
        %v1244 = vpack.c.b16 %v1162, %v1161
        %v1245 = vpack.c.b16 %v1164, %v1163
        %v1246 = vpack.c.b16 %v1166, %v1165
        %v1247 = vpack.c.b16 %v1168, %v1167
        %v1248 = vpack.c.b16 %v1170, %v1169
        %v1249 = vpack.c.b16 %v1172, %v1171
        %v1250 = vpack.c.b16 %v1174, %v1173
        %v1251 = vpack.c.b16 %v1176, %v1175
        %v1252 = vpack.c.b16 %v1178, %v1177
        %v1253 = vpack.c.b16 %v1180, %v1179
        %v1254 = vpack.c.b16 %v1182, %v1181
        %v1255 = vpack.c.b16 %v1184, %v1183
        %v1256 = vpack.c.b16 %v1186, %v1185
        %v1257 = vpack.c.b16 %v1188, %v1187
        %v1258 = vpack.c.b16 %v1190, %v1189
        %v1259 = vpack.c.b16 %v1192, %v1191
        %v1260 = vpack.c.b16 %v1194, %v1193
        %v1261 = vpack.c.b16 %v1196, %v1195
        %v1262 = vpack.c.b16 %v1198, %v1197
        %v1327 = vld [vmem:[#allocation6] sm:$0xf]
        %v1328 = vld [vmem:[#allocation6 + $0x4] sm:$0xf]
        %v1329 = vld [vmem:[#allocation6 + $0x8] sm:$0xf]
        %v1330 = vld [vmem:[#allocation6 + $0xc] sm:$0xf]
        %v1331 = vld [vmem:[#allocation6 + $0x10] sm:$0xf]
        %v1332 = vld [vmem:[#allocation6 + $0x14] sm:$0xf]
        %v1333 = vld [vmem:[#allocation6 + $0x18] sm:$0xf]
        %v1334 = vld [vmem:[#allocation6 + $0x1c] sm:$0xf]
        %v1335 = vld [vmem:[#allocation6 + $0x20] sm:$0xf]
        %v1336 = vld [vmem:[#allocation6 + $0x24] sm:$0xf]
        %v1337 = vld [vmem:[#allocation6 + $0x28] sm:$0xf]
        %v1338 = vld [vmem:[#allocation6 + $0x2c] sm:$0xf]
        %v1339 = vld [vmem:[#allocation6 + $0x30] sm:$0xf]
        %v1340 = vld [vmem:[#allocation6 + $0x34] sm:$0xf]
        %v1341 = vld [vmem:[#allocation6 + $0x38] sm:$0xf]
        %v1342 = vld [vmem:[#allocation6 + $0x3c] sm:$0xf]
        %v1343 = vld [vmem:[#allocation6 + $0x40] sm:$0xf]
        %v1344 = vld [vmem:[#allocation6 + $0x44] sm:$0xf]
        %v1345 = vld [vmem:[#allocation6 + $0x48] sm:$0xf]
        %v1346 = vld [vmem:[#allocation6 + $0x4c] sm:$0xf]
        %v1347 = vld [vmem:[#allocation6 + $0x50] sm:$0xf]
        %v1348 = vld [vmem:[#allocation6 + $0x54] sm:$0xf]
        %v1349 = vld [vmem:[#allocation6 + $0x58] sm:$0xf]
        %v1350 = vld [vmem:[#allocation6 + $0x5c] sm:$0xf]
        %v1351 = vld [vmem:[#allocation6 + $0x60] sm:$0xf]
        %v1352 = vld [vmem:[#allocation6 + $0x64] sm:$0xf]
        %v1353 = vld [vmem:[#allocation6 + $0x68] sm:$0xf]
        %v1354 = vld [vmem:[#allocation6 + $0x6c] sm:$0xf]
        %v1355 = vld [vmem:[#allocation6 + $0x70] sm:$0xf]
        %v1356 = vld [vmem:[#allocation6 + $0x74] sm:$0xf]
        %v1357 = vld [vmem:[#allocation6 + $0x78] sm:$0xf]
        %v1358 = vld [vmem:[#allocation6 + $0x7c] sm:$0xf]
        %v1359 = vld [vmem:[%s3] sm:$0x1]
        %v1361 = vlaneseq
        %v1362 = vshrl.u32 %v1361, 7
        %v1363 = vsub.s32 0, %v1362
        %v1364 = vrot.slane %v1359, %v1363
        %v1398 = vunpack.c.l.b16 %v1327
        %v1399 = vunpack.c.l.b16 %v1328
        %v1400 = vunpack.c.l.b16 %v1329
        %v1401 = vunpack.c.l.b16 %v1330
        %v1402 = vunpack.c.l.b16 %v1331
        %v1403 = vunpack.c.l.b16 %v1332
        %v1404 = vunpack.c.l.b16 %v1333
        %v1405 = vunpack.c.l.b16 %v1334
        %v1406 = vunpack.c.l.b16 %v1335
        %v1407 = vunpack.c.l.b16 %v1336
        %v1408 = vunpack.c.l.b16 %v1337
        %v1409 = vunpack.c.l.b16 %v1338
        %v1410 = vunpack.c.l.b16 %v1339
        %v1411 = vunpack.c.l.b16 %v1340
        %v1412 = vunpack.c.l.b16 %v1341
        %v1413 = vunpack.c.l.b16 %v1342
        %v1414 = vunpack.c.l.b16 %v1343
        %v1415 = vunpack.c.l.b16 %v1344
        %v1416 = vunpack.c.l.b16 %v1345
        %v1417 = vunpack.c.l.b16 %v1346
        %v1418 = vunpack.c.l.b16 %v1347
        %v1419 = vunpack.c.l.b16 %v1348
        %v1420 = vunpack.c.l.b16 %v1349
        %v1421 = vunpack.c.l.b16 %v1350
        %v1422 = vunpack.c.l.b16 %v1351
        %v1423 = vunpack.c.l.b16 %v1352
        %v1424 = vunpack.c.l.b16 %v1353
        %v1425 = vunpack.c.l.b16 %v1354
        %v1426 = vunpack.c.l.b16 %v1355
        %v1427 = vunpack.c.l.b16 %v1356
        %v1428 = vunpack.c.l.b16 %v1357
        %v1429 = vunpack.c.l.b16 %v1358
        %v1430 = vpack.c.b16 %v1399, %v1398
        %v1431 = vpack.c.b16 %v1401, %v1400
        %v1432 = vpack.c.b16 %v1403, %v1402
        %v1433 = vpack.c.b16 %v1405, %v1404
        %v1434 = vpack.c.b16 %v1407, %v1406
        %v1435 = vpack.c.b16 %v1409, %v1408
        %v1436 = vpack.c.b16 %v1411, %v1410
        %v1437 = vpack.c.b16 %v1413, %v1412
        %v1438 = vpack.c.b16 %v1415, %v1414
        %v1439 = vpack.c.b16 %v1417, %v1416
        %v1440 = vpack.c.b16 %v1419, %v1418
        %v1441 = vpack.c.b16 %v1421, %v1420
        %v1442 = vpack.c.b16 %v1423, %v1422
        %v1443 = vpack.c.b16 %v1425, %v1424
        %v1444 = vpack.c.b16 %v1427, %v1426
        %v1445 = vpack.c.b16 %v1429, %v1428
        %1462 = vmatprep.subr.bf16.mxu0 0
        %1463 = vmatpush1.bf16.msra.mxu0 %v1430
        %1464 = vmatprep.subr.bf16.mxu0 0
        %1465 = vmatpush1.bf16.msra.mxu0 %v1431
        %1466 = vmatprep.subr.bf16.mxu0 0
        %1467 = vmatpush1.bf16.msra.mxu0 %v1432
        %1468 = vmatprep.subr.bf16.mxu0 0
        %1469 = vmatpush1.bf16.msra.mxu0 %v1433
        %1470 = vmatprep.subr.bf16.mxu0 0
        %1471 = vmatpush1.bf16.msra.mxu0 %v1434
        %1472 = vmatprep.subr.bf16.mxu0 0
        %1473 = vmatpush1.bf16.msra.mxu0 %v1435
        %1474 = vmatprep.subr.bf16.mxu0 0
        %1475 = vmatpush1.bf16.msra.mxu0 %v1436
        %1476 = vmatprep.subr.bf16.mxu0 0
        %1477 = vmatpush1.bf16.msra.mxu0 %v1437
        %1478 = vmatprep.subr.bf16.mxu0 0
        %1479 = vmatpush1.bf16.msra.mxu0 %v1438
        %1480 = vmatprep.subr.bf16.mxu0 0
        %1481 = vmatpush1.bf16.msra.mxu0 %v1439
        %1482 = vmatprep.subr.bf16.mxu0 0
        %1483 = vmatpush1.bf16.msra.mxu0 %v1440
        %1484 = vmatprep.subr.bf16.mxu0 0
        %1485 = vmatpush1.bf16.msra.mxu0 %v1441
        %1486 = vmatprep.subr.bf16.mxu0 0
        %1487 = vmatpush1.bf16.msra.mxu0 %v1442
        %1488 = vmatprep.subr.bf16.mxu0 0
        %1489 = vmatpush1.bf16.msra.mxu0 %v1443
        %1490 = vmatprep.subr.bf16.mxu0 0
        %1491 = vmatpush1.bf16.msra.mxu0 %v1444
        %1492 = vmatprep.subr.bf16.mxu0 0
        %1493 = vmatpush1.bf16.msra.mxu0 %v1445
        %1494 = vmatprep.mubr.bf16.mxu0 %v1199
        %1495 = vmatmul.mubr.bf16.gmra.mrb[0].mxu0 %v815
        %v1496 = vpop.f32.mrb[0].mxu0
        %v1497 = vadd.f32 %v1364, %v1496
        %v1498 = vpop.f32.mrb[0].mxu0
        %v1499 = vpop.f32.mrb[0].mxu0
        %v1500 = vadd.f32 %v1364, %v1499
        %v1501 = vpop.f32.mrb[0].mxu0
        %1502 = vmatprep.mubr.bf16.mxu0 %v1200
        %1503 = vmatmul.mubr.bf16.gmra.mrb[0].mxu0 %v816
        %v1504 = vpop.f32.mrb[0].mxu0
        %v1505 = vadd.f32 %v1364, %v1504
        %v1506 = vpop.f32.mrb[0].mxu0
        %v1507 = vpop.f32.mrb[0].mxu0
        %v1508 = vadd.f32 %v1364, %v1507
        %v1509 = vpop.f32.mrb[0].mxu0
        %1510 = vmatprep.mubr.bf16.mxu0 %v1201
        %1511 = vmatmul.mubr.bf16.gmra.mrb[0].mxu0 %v817
        %v1512 = vpop.f32.mrb[0].mxu0
        %v1513 = vadd.f32 %v1364, %v1512
        %v1514 = vpop.f32.mrb[0].mxu0
        %v1515 = vpop.f32.mrb[0].mxu0
        %v1516 = vadd.f32 %v1364, %v1515
        %v1517 = vpop.f32.mrb[0].mxu0
        %1518 = vmatprep.mubr.bf16.mxu0 %v1202
        %1519 = vmatmul.mubr.bf16.gmra.mrb[0].mxu0 %v818
        %v1520 = vpop.f32.mrb[0].mxu0
        %v1521 = vadd.f32 %v1364, %v1520
        %v1522 = vpop.f32.mrb[0].mxu0
        %v1523 = vpop.f32.mrb[0].mxu0
        %v1524 = vadd.f32 %v1364, %v1523
        %v1525 = vpop.f32.mrb[0].mxu0
        %1526 = vmatprep.mubr.bf16.mxu0 %v1203
        %1527 = vmatmul.mubr.bf16.gmra.mrb[0].mxu0 %v819
        %v1528 = vpop.f32.mrb[0].mxu0
        %v1529 = vadd.f32 %v1364, %v1528
        %v1530 = vpop.f32.mrb[0].mxu0
        %v1531 = vpop.f32.mrb[0].mxu0
        %v1532 = vadd.f32 %v1364, %v1531
        %v1533 = vpop.f32.mrb[0].mxu0
        %1534 = vmatprep.mubr.bf16.mxu0 %v1204
        %1535 = vmatmul.mubr.bf16.gmra.mrb[0].mxu0 %v820
        %v1536 = vpop.f32.mrb[0].mxu0
        %v1537 = vadd.f32 %v1364, %v1536
        %v1538 = vpop.f32.mrb[0].mxu0
        %v1539 = vpop.f32.mrb[0].mxu0
        %v1540 = vadd.f32 %v1364, %v1539
        %v1541 = vpop.f32.mrb[0].mxu0
        %1542 = vmatprep.mubr.bf16.mxu0 %v1205
        %1543 = vmatmul.mubr.bf16.gmra.mrb[0].mxu0 %v821
        %v1544 = vpop.f32.mrb[0].mxu0
        %v1545 = vadd.f32 %v1364, %v1544
        %v1546 = vpop.f32.mrb[0].mxu0
        %v1547 = vpop.f32.mrb[0].mxu0
        %v1548 = vadd.f32 %v1364, %v1547
        %v1549 = vpop.f32.mrb[0].mxu0
        %1550 = vmatprep.mubr.bf16.mxu0 %v1206
        %1551 = vmatmul.mubr.bf16.gmra.mrb[0].mxu0 %v822
        %v1552 = vpop.f32.mrb[0].mxu0
        %v1553 = vadd.f32 %v1364, %v1552
        %v1554 = vpop.f32.mrb[0].mxu0
        %v1555 = vpop.f32.mrb[0].mxu0
        %v1556 = vadd.f32 %v1364, %v1555
        %v1557 = vpop.f32.mrb[0].mxu0
        %1558 = vmatprep.mubr.bf16.mxu0 %v1207
        %1559 = vmatmul.mubr.bf16.gmra.mrb[0].mxu0 %v823
        %v1560 = vpop.f32.mrb[0].mxu0
        %v1561 = vadd.f32 %v1364, %v1560
        %v1562 = vpop.f32.mrb[0].mxu0
        %v1563 = vpop.f32.mrb[0].mxu0
        %v1564 = vadd.f32 %v1364, %v1563
        %v1565 = vpop.f32.mrb[0].mxu0
        %1566 = vmatprep.mubr.bf16.mxu0 %v1208
        %1567 = vmatmul.mubr.bf16.gmra.mrb[0].mxu0 %v824
        %v1568 = vpop.f32.mrb[0].mxu0
        %v1569 = vadd.f32 %v1364, %v1568
        %v1570 = vpop.f32.mrb[0].mxu0
        %v1571 = vpop.f32.mrb[0].mxu0
        %v1572 = vadd.f32 %v1364, %v1571
        %v1573 = vpop.f32.mrb[0].mxu0
        %1574 = vmatprep.mubr.bf16.mxu0 %v1209
        %1575 = vmatmul.mubr.bf16.gmra.mrb[0].mxu0 %v825
        %v1576 = vpop.f32.mrb[0].mxu0
        %v1577 = vadd.f32 %v1364, %v1576
        %v1578 = vpop.f32.mrb[0].mxu0
        %v1579 = vpop.f32.mrb[0].mxu0
        %v1580 = vadd.f32 %v1364, %v1579
        %v1581 = vpop.f32.mrb[0].mxu0
        %1582 = vmatprep.mubr.bf16.mxu0 %v1210
        %1583 = vmatmul.mubr.bf16.gmra.mrb[0].mxu0 %v826
        %v1584 = vpop.f32.mrb[0].mxu0
        %v1585 = vadd.f32 %v1364, %v1584
        %v1586 = vpop.f32.mrb[0].mxu0
        %v1587 = vpop.f32.mrb[0].mxu0
        %v1588 = vadd.f32 %v1364, %v1587
        %v1589 = vpop.f32.mrb[0].mxu0
        %1590 = vmatprep.mubr.bf16.mxu0 %v1211
        %1591 = vmatmul.mubr.bf16.gmra.mrb[0].mxu0 %v827
        %v1592 = vpop.f32.mrb[0].mxu0
        %v1593 = vadd.f32 %v1364, %v1592
        %v1594 = vpop.f32.mrb[0].mxu0
        %v1595 = vpop.f32.mrb[0].mxu0
        %v1596 = vadd.f32 %v1364, %v1595
        %v1597 = vpop.f32.mrb[0].mxu0
        %1598 = vmatprep.mubr.bf16.mxu0 %v1212
        %1599 = vmatmul.mubr.bf16.gmra.mrb[0].mxu0 %v828
        %v1600 = vpop.f32.mrb[0].mxu0
        %v1601 = vadd.f32 %v1364, %v1600
        %v1602 = vpop.f32.mrb[0].mxu0
        %v1603 = vpop.f32.mrb[0].mxu0
        %v1604 = vadd.f32 %v1364, %v1603
        %v1605 = vpop.f32.mrb[0].mxu0
        %1606 = vmatprep.mubr.bf16.mxu0 %v1213
        %1607 = vmatmul.mubr.bf16.gmra.mrb[0].mxu0 %v829
        %v1608 = vpop.f32.mrb[0].mxu0
        %v1609 = vadd.f32 %v1364, %v1608
        %v1610 = vpop.f32.mrb[0].mxu0
        %v1611 = vpop.f32.mrb[0].mxu0
        %v1612 = vadd.f32 %v1364, %v1611
        %v1613 = vpop.f32.mrb[0].mxu0
        %1614 = vmatprep.mubr.bf16.mxu0 %v1214
        %1615 = vmatmul.mubr.bf16.gmra.mrb[0].mxu0 %v830
        %v1616 = vpop.f32.mrb[0].mxu0
        %v1617 = vadd.f32 %v1364, %v1616
        %v1618 = vpop.f32.mrb[0].mxu0
        %v1619 = vpop.f32.mrb[0].mxu0
        %v1620 = vadd.f32 %v1364, %v1619
        %v1621 = vpop.f32.mrb[0].mxu0
        %1622 = vmatprep.mubr.bf16.mxu0 %v1215
        %1623 = vmatmul.mubr.bf16.gmra.mrb[0].mxu0 %v831
        %v1624 = vpop.f32.mrb[0].mxu0
        %v1625 = vadd.f32 %v1364, %v1624
        %v1626 = vpop.f32.mrb[0].mxu0
        %v1627 = vpop.f32.mrb[0].mxu0
        %v1628 = vadd.f32 %v1364, %v1627
        %v1629 = vpop.f32.mrb[0].mxu0
        %1630 = vmatprep.mubr.bf16.mxu0 %v1216
        %1631 = vmatmul.mubr.bf16.gmra.mrb[0].mxu0 %v832
        %v1632 = vpop.f32.mrb[0].mxu0
        %v1633 = vadd.f32 %v1364, %v1632
        %v1634 = vpop.f32.mrb[0].mxu0
        %v1635 = vpop.f32.mrb[0].mxu0
        %v1636 = vadd.f32 %v1364, %v1635
        %v1637 = vpop.f32.mrb[0].mxu0
        %1638 = vmatprep.mubr.bf16.mxu0 %v1217
        %1639 = vmatmul.mubr.bf16.gmra.mrb[0].mxu0 %v833
        %v1640 = vpop.f32.mrb[0].mxu0
        %v1641 = vadd.f32 %v1364, %v1640
        %v1642 = vpop.f32.mrb[0].mxu0
        %v1643 = vpop.f32.mrb[0].mxu0
        %v1644 = vadd.f32 %v1364, %v1643
        %v1645 = vpop.f32.mrb[0].mxu0
        %1646 = vmatprep.mubr.bf16.mxu0 %v1218
        %1647 = vmatmul.mubr.bf16.gmra.mrb[0].mxu0 %v834
        %v1648 = vpop.f32.mrb[0].mxu0
        %v1649 = vadd.f32 %v1364, %v1648
        %v1650 = vpop.f32.mrb[0].mxu0
        %v1651 = vpop.f32.mrb[0].mxu0
        %v1652 = vadd.f32 %v1364, %v1651
        %v1653 = vpop.f32.mrb[0].mxu0
        %1654 = vmatprep.mubr.bf16.mxu0 %v1219
        %1655 = vmatmul.mubr.bf16.gmra.mrb[0].mxu0 %v835
        %v1656 = vpop.f32.mrb[0].mxu0
        %v1657 = vadd.f32 %v1364, %v1656
        %v1658 = vpop.f32.mrb[0].mxu0
        %v1659 = vpop.f32.mrb[0].mxu0
        %v1660 = vadd.f32 %v1364, %v1659
        %v1661 = vpop.f32.mrb[0].mxu0
        %1662 = vmatprep.mubr.bf16.mxu0 %v1220
        %1663 = vmatmul.mubr.bf16.gmra.mrb[0].mxu0 %v836
        %v1664 = vpop.f32.mrb[0].mxu0
        %v1665 = vadd.f32 %v1364, %v1664
        %v1666 = vpop.f32.mrb[0].mxu0
        %v1667 = vpop.f32.mrb[0].mxu0
        %v1668 = vadd.f32 %v1364, %v1667
        %v1669 = vpop.f32.mrb[0].mxu0
        %1670 = vmatprep.mubr.bf16.mxu0 %v1221
        %1671 = vmatmul.mubr.bf16.gmra.mrb[0].mxu0 %v837
        %v1672 = vpop.f32.mrb[0].mxu0
        %v1673 = vadd.f32 %v1364, %v1672
        %v1674 = vpop.f32.mrb[0].mxu0
        %v1675 = vpop.f32.mrb[0].mxu0
        %v1676 = vadd.f32 %v1364, %v1675
        %v1677 = vpop.f32.mrb[0].mxu0
        %1678 = vmatprep.mubr.bf16.mxu0 %v1222
        %1679 = vmatmul.mubr.bf16.gmra.mrb[0].mxu0 %v838
        %v1680 = vpop.f32.mrb[0].mxu0
        %v1681 = vadd.f32 %v1364, %v1680
        %v1682 = vpop.f32.mrb[0].mxu0
        %v1683 = vpop.f32.mrb[0].mxu0
        %v1684 = vadd.f32 %v1364, %v1683
        %v1685 = vpop.f32.mrb[0].mxu0
        %1686 = vmatprep.mubr.bf16.mxu0 %v1223
        %1687 = vmatmul.mubr.bf16.gmra.mrb[0].mxu0 %v839
        %v1688 = vpop.f32.mrb[0].mxu0
        %v1689 = vadd.f32 %v1364, %v1688
        %v1690 = vpop.f32.mrb[0].mxu0
        %v1691 = vpop.f32.mrb[0].mxu0
        %v1692 = vadd.f32 %v1364, %v1691
        %v1693 = vpop.f32.mrb[0].mxu0
        %1694 = vmatprep.mubr.bf16.mxu0 %v1224
        %1695 = vmatmul.mubr.bf16.gmra.mrb[0].mxu0 %v840
        %v1696 = vpop.f32.mrb[0].mxu0
        %v1697 = vadd.f32 %v1364, %v1696
        %v1698 = vpop.f32.mrb[0].mxu0
        %v1699 = vpop.f32.mrb[0].mxu0
        %v1700 = vadd.f32 %v1364, %v1699
        %v1701 = vpop.f32.mrb[0].mxu0
        %1702 = vmatprep.mubr.bf16.mxu0 %v1225
        %1703 = vmatmul.mubr.bf16.gmra.mrb[0].mxu0 %v841
        %v1704 = vpop.f32.mrb[0].mxu0
        %v1705 = vadd.f32 %v1364, %v1704
        %v1706 = vpop.f32.mrb[0].mxu0
        %v1707 = vpop.f32.mrb[0].mxu0
        %v1708 = vadd.f32 %v1364, %v1707
        %v1709 = vpop.f32.mrb[0].mxu0
        %1710 = vmatprep.mubr.bf16.mxu0 %v1226
        %1711 = vmatmul.mubr.bf16.gmra.mrb[0].mxu0 %v842
        %v1712 = vpop.f32.mrb[0].mxu0
        %v1713 = vadd.f32 %v1364, %v1712
        %v1714 = vpop.f32.mrb[0].mxu0
        %v1715 = vpop.f32.mrb[0].mxu0
        %v1716 = vadd.f32 %v1364, %v1715
        %v1717 = vpop.f32.mrb[0].mxu0
        %1718 = vmatprep.mubr.bf16.mxu0 %v1227
        %1719 = vmatmul.mubr.bf16.gmra.mrb[0].mxu0 %v843
        %v1720 = vpop.f32.mrb[0].mxu0
        %v1721 = vadd.f32 %v1364, %v1720
        %v1722 = vpop.f32.mrb[0].mxu0
        %v1723 = vpop.f32.mrb[0].mxu0
        %v1724 = vadd.f32 %v1364, %v1723
        %v1725 = vpop.f32.mrb[0].mxu0
        %1726 = vmatprep.mubr.bf16.mxu0 %v1228
        %1727 = vmatmul.mubr.bf16.gmra.mrb[0].mxu0 %v844
        %v1728 = vpop.f32.mrb[0].mxu0
        %v1729 = vadd.f32 %v1364, %v1728
        %v1730 = vpop.f32.mrb[0].mxu0
        %v1731 = vpop.f32.mrb[0].mxu0
        %v1732 = vadd.f32 %v1364, %v1731
        %v1733 = vpop.f32.mrb[0].mxu0
        %1734 = vmatprep.mubr.bf16.mxu0 %v1229
        %1735 = vmatmul.mubr.bf16.gmra.mrb[0].mxu0 %v845
        %v1736 = vpop.f32.mrb[0].mxu0
        %v1737 = vadd.f32 %v1364, %v1736
        %v1738 = vpop.f32.mrb[0].mxu0
        %v1739 = vpop.f32.mrb[0].mxu0
        %v1740 = vadd.f32 %v1364, %v1739
        %v1741 = vpop.f32.mrb[0].mxu0
        %1742 = vmatprep.mubr.bf16.mxu0 %v1230
        %1743 = vmatmul.mubr.bf16.gmra.mrb[0].mxu0 %v846
        %v1744 = vpop.f32.mrb[0].mxu0
        %v1745 = vadd.f32 %v1364, %v1744
        %v1746 = vpop.f32.mrb[0].mxu0
        %v1747 = vpop.f32.mrb[0].mxu0
        %v1748 = vadd.f32 %v1364, %v1747
        %v1749 = vpop.f32.mrb[0].mxu0
        %1750 = vmatprep.mubr.bf16.mxu0 %v1231
        %1751 = vmatmul.mubr.bf16.gmra.mrb[0].mxu0 %v847
        %v1752 = vpop.f32.mrb[0].mxu0
        %v1753 = vadd.f32 %v1364, %v1752
        %v1754 = vpop.f32.mrb[0].mxu0
        %v1755 = vpop.f32.mrb[0].mxu0
        %v1756 = vadd.f32 %v1364, %v1755
        %v1757 = vpop.f32.mrb[0].mxu0
        %1758 = vmatprep.mubr.bf16.mxu0 %v1232
        %1759 = vmatmul.mubr.bf16.gmra.mrb[0].mxu0 %v848
        %v1760 = vpop.f32.mrb[0].mxu0
        %v1761 = vadd.f32 %v1364, %v1760
        %v1762 = vpop.f32.mrb[0].mxu0
        %v1763 = vpop.f32.mrb[0].mxu0
        %v1764 = vadd.f32 %v1364, %v1763
        %v1765 = vpop.f32.mrb[0].mxu0
        %1766 = vmatprep.mubr.bf16.mxu0 %v1233
        %1767 = vmatmul.mubr.bf16.gmra.mrb[0].mxu0 %v849
        %v1768 = vpop.f32.mrb[0].mxu0
        %v1769 = vadd.f32 %v1364, %v1768
        %v1770 = vpop.f32.mrb[0].mxu0
        %v1771 = vpop.f32.mrb[0].mxu0
        %v1772 = vadd.f32 %v1364, %v1771
        %v1773 = vpop.f32.mrb[0].mxu0
        %1774 = vmatprep.mubr.bf16.mxu0 %v1234
        %1775 = vmatmul.mubr.bf16.gmra.mrb[0].mxu0 %v850
        %v1776 = vpop.f32.mrb[0].mxu0
        %v1777 = vadd.f32 %v1364, %v1776
        %v1778 = vpop.f32.mrb[0].mxu0
        %v1779 = vpop.f32.mrb[0].mxu0
        %v1780 = vadd.f32 %v1364, %v1779
        %v1781 = vpop.f32.mrb[0].mxu0
        %1782 = vmatprep.mubr.bf16.mxu0 %v1235
        %1783 = vmatmul.mubr.bf16.gmra.mrb[0].mxu0 %v851
        %v1784 = vpop.f32.mrb[0].mxu0
        %v1785 = vadd.f32 %v1364, %v1784
        %v1786 = vpop.f32.mrb[0].mxu0
        %v1787 = vpop.f32.mrb[0].mxu0
        %v1788 = vadd.f32 %v1364, %v1787
        %v1789 = vpop.f32.mrb[0].mxu0
        %1790 = vmatprep.mubr.bf16.mxu0 %v1236
        %1791 = vmatmul.mubr.bf16.gmra.mrb[0].mxu0 %v852
        %v1792 = vpop.f32.mrb[0].mxu0
        %v1793 = vadd.f32 %v1364, %v1792
        %v1794 = vpop.f32.mrb[0].mxu0
        %v1795 = vpop.f32.mrb[0].mxu0
        %v1796 = vadd.f32 %v1364, %v1795
        %v1797 = vpop.f32.mrb[0].mxu0
        %1798 = vmatprep.mubr.bf16.mxu0 %v1237
        %1799 = vmatmul.mubr.bf16.gmra.mrb[0].mxu0 %v853
        %v1800 = vpop.f32.mrb[0].mxu0
        %v1801 = vadd.f32 %v1364, %v1800
        %v1802 = vpop.f32.mrb[0].mxu0
        %v1803 = vpop.f32.mrb[0].mxu0
        %v1804 = vadd.f32 %v1364, %v1803
        %v1805 = vpop.f32.mrb[0].mxu0
        %1806 = vmatprep.mubr.bf16.mxu0 %v1238
        %1807 = vmatmul.mubr.bf16.gmra.mrb[0].mxu0 %v854
        %v1808 = vpop.f32.mrb[0].mxu0
        %v1809 = vadd.f32 %v1364, %v1808
        %v1810 = vpop.f32.mrb[0].mxu0
        %v1811 = vpop.f32.mrb[0].mxu0
        %v1812 = vadd.f32 %v1364, %v1811
        %v1813 = vpop.f32.mrb[0].mxu0
        %1814 = vmatprep.mubr.bf16.mxu0 %v1239
        %1815 = vmatmul.mubr.bf16.gmra.mrb[0].mxu0 %v855
        %v1816 = vpop.f32.mrb[0].mxu0
        %v1817 = vadd.f32 %v1364, %v1816
        %v1818 = vpop.f32.mrb[0].mxu0
        %v1819 = vpop.f32.mrb[0].mxu0
        %v1820 = vadd.f32 %v1364, %v1819
        %v1821 = vpop.f32.mrb[0].mxu0
        %1822 = vmatprep.mubr.bf16.mxu0 %v1240
        %1823 = vmatmul.mubr.bf16.gmra.mrb[0].mxu0 %v856
        %v1824 = vpop.f32.mrb[0].mxu0
        %v1825 = vadd.f32 %v1364, %v1824
        %v1826 = vpop.f32.mrb[0].mxu0
        %v1827 = vpop.f32.mrb[0].mxu0
        %v1828 = vadd.f32 %v1364, %v1827
        %v1829 = vpop.f32.mrb[0].mxu0
        %1830 = vmatprep.mubr.bf16.mxu0 %v1241
        %1831 = vmatmul.mubr.bf16.gmra.mrb[0].mxu0 %v857
        %v1832 = vpop.f32.mrb[0].mxu0
        %v1833 = vadd.f32 %v1364, %v1832
        %v1834 = vpop.f32.mrb[0].mxu0
        %v1835 = vpop.f32.mrb[0].mxu0
        %v1836 = vadd.f32 %v1364, %v1835
        %v1837 = vpop.f32.mrb[0].mxu0
        %1838 = vmatprep.mubr.bf16.mxu0 %v1242
        %1839 = vmatmul.mubr.bf16.gmra.mrb[0].mxu0 %v858
        %v1840 = vpop.f32.mrb[0].mxu0
        %v1841 = vadd.f32 %v1364, %v1840
        %v1842 = vpop.f32.mrb[0].mxu0
        %v1843 = vpop.f32.mrb[0].mxu0
        %v1844 = vadd.f32 %v1364, %v1843
        %v1845 = vpop.f32.mrb[0].mxu0
        %1846 = vmatprep.mubr.bf16.mxu0 %v1243
        %1847 = vmatmul.mubr.bf16.gmra.mrb[0].mxu0 %v859
        %v1848 = vpop.f32.mrb[0].mxu0
        %v1849 = vadd.f32 %v1364, %v1848
        %v1850 = vpop.f32.mrb[0].mxu0
        %v1851 = vpop.f32.mrb[0].mxu0
        %v1852 = vadd.f32 %v1364, %v1851
        %v1853 = vpop.f32.mrb[0].mxu0
        %1854 = vmatprep.mubr.bf16.mxu0 %v1244
        %1855 = vmatmul.mubr.bf16.gmra.mrb[0].mxu0 %v860
        %v1856 = vpop.f32.mrb[0].mxu0
        %v1857 = vadd.f32 %v1364, %v1856
        %v1858 = vpop.f32.mrb[0].mxu0
        %v1859 = vpop.f32.mrb[0].mxu0
        %v1860 = vadd.f32 %v1364, %v1859
        %v1861 = vpop.f32.mrb[0].mxu0
        %1862 = vmatprep.mubr.bf16.mxu0 %v1245
        %1863 = vmatmul.mubr.bf16.gmra.mrb[0].mxu0 %v861
        %v1864 = vpop.f32.mrb[0].mxu0
        %v1865 = vadd.f32 %v1364, %v1864
        %v1866 = vpop.f32.mrb[0].mxu0
        %v1867 = vpop.f32.mrb[0].mxu0
        %v1868 = vadd.f32 %v1364, %v1867
        %v1869 = vpop.f32.mrb[0].mxu0
        %1870 = vmatprep.mubr.bf16.mxu0 %v1246
        %1871 = vmatmul.mubr.bf16.gmra.mrb[0].mxu0 %v862
        %v1872 = vpop.f32.mrb[0].mxu0
        %v1873 = vadd.f32 %v1364, %v1872
        %v1874 = vpop.f32.mrb[0].mxu0
        %v1875 = vpop.f32.mrb[0].mxu0
        %v1876 = vadd.f32 %v1364, %v1875
        %v1877 = vpop.f32.mrb[0].mxu0
        %1878 = vmatprep.mubr.bf16.mxu0 %v1247
        %1879 = vmatmul.mubr.bf16.gmra.mrb[0].mxu0 %v863
        %v1880 = vpop.f32.mrb[0].mxu0
        %v1881 = vadd.f32 %v1364, %v1880
        %v1882 = vpop.f32.mrb[0].mxu0
        %v1883 = vpop.f32.mrb[0].mxu0
        %v1884 = vadd.f32 %v1364, %v1883
        %v1885 = vpop.f32.mrb[0].mxu0
        %1886 = vmatprep.mubr.bf16.mxu0 %v1248
        %1887 = vmatmul.mubr.bf16.gmra.mrb[0].mxu0 %v864
        %v1888 = vpop.f32.mrb[0].mxu0
        %v1889 = vadd.f32 %v1364, %v1888
        %v1890 = vpop.f32.mrb[0].mxu0
        %v1891 = vpop.f32.mrb[0].mxu0
        %v1892 = vadd.f32 %v1364, %v1891
        %v1893 = vpop.f32.mrb[0].mxu0
        %1894 = vmatprep.mubr.bf16.mxu0 %v1249
        %1895 = vmatmul.mubr.bf16.gmra.mrb[0].mxu0 %v865
        %v1896 = vpop.f32.mrb[0].mxu0
        %v1897 = vadd.f32 %v1364, %v1896
        %v1898 = vpop.f32.mrb[0].mxu0
        %v1899 = vpop.f32.mrb[0].mxu0
        %v1900 = vadd.f32 %v1364, %v1899
        %v1901 = vpop.f32.mrb[0].mxu0
        %1902 = vmatprep.mubr.bf16.mxu0 %v1250
        %1903 = vmatmul.mubr.bf16.gmra.mrb[0].mxu0 %v866
        %v1904 = vpop.f32.mrb[0].mxu0
        %v1905 = vadd.f32 %v1364, %v1904
        %v1906 = vpop.f32.mrb[0].mxu0
        %v1907 = vpop.f32.mrb[0].mxu0
        %v1908 = vadd.f32 %v1364, %v1907
        %v1909 = vpop.f32.mrb[0].mxu0
        %1910 = vmatprep.mubr.bf16.mxu0 %v1251
        %1911 = vmatmul.mubr.bf16.gmra.mrb[0].mxu0 %v867
        %v1912 = vpop.f32.mrb[0].mxu0
        %v1913 = vadd.f32 %v1364, %v1912
        %v1914 = vpop.f32.mrb[0].mxu0
        %v1915 = vpop.f32.mrb[0].mxu0
        %v1916 = vadd.f32 %v1364, %v1915
        %v1917 = vpop.f32.mrb[0].mxu0
        %1918 = vmatprep.mubr.bf16.mxu0 %v1252
        %1919 = vmatmul.mubr.bf16.gmra.mrb[0].mxu0 %v868
        %v1920 = vpop.f32.mrb[0].mxu0
        %v1921 = vadd.f32 %v1364, %v1920
        %v1922 = vpop.f32.mrb[0].mxu0
        %v1923 = vpop.f32.mrb[0].mxu0
        %v1924 = vadd.f32 %v1364, %v1923
        %v1925 = vpop.f32.mrb[0].mxu0
        %1926 = vmatprep.mubr.bf16.mxu0 %v1253
        %1927 = vmatmul.mubr.bf16.gmra.mrb[0].mxu0 %v869
        %v1928 = vpop.f32.mrb[0].mxu0
        %v1929 = vadd.f32 %v1364, %v1928
        %v1930 = vpop.f32.mrb[0].mxu0
        %v1931 = vpop.f32.mrb[0].mxu0
        %v1932 = vadd.f32 %v1364, %v1931
        %v1933 = vpop.f32.mrb[0].mxu0
        %1934 = vmatprep.mubr.bf16.mxu0 %v1254
        %1935 = vmatmul.mubr.bf16.gmra.mrb[0].mxu0 %v870
        %v1936 = vpop.f32.mrb[0].mxu0
        %v1937 = vadd.f32 %v1364, %v1936
        %v1938 = vpop.f32.mrb[0].mxu0
        %v1939 = vpop.f32.mrb[0].mxu0
        %v1940 = vadd.f32 %v1364, %v1939
        %v1941 = vpop.f32.mrb[0].mxu0
        %1942 = vmatprep.mubr.bf16.mxu0 %v1255
        %1943 = vmatmul.mubr.bf16.gmra.mrb[0].mxu0 %v871
        %v1944 = vpop.f32.mrb[0].mxu0
        %v1945 = vadd.f32 %v1364, %v1944
        %v1946 = vpop.f32.mrb[0].mxu0
        %v1947 = vpop.f32.mrb[0].mxu0
        %v1948 = vadd.f32 %v1364, %v1947
        %v1949 = vpop.f32.mrb[0].mxu0
        %1950 = vmatprep.mubr.bf16.mxu0 %v1256
        %1951 = vmatmul.mubr.bf16.gmra.mrb[0].mxu0 %v872
        %v1952 = vpop.f32.mrb[0].mxu0
        %v1953 = vadd.f32 %v1364, %v1952
        %v1954 = vpop.f32.mrb[0].mxu0
        %v1955 = vpop.f32.mrb[0].mxu0
        %v1956 = vadd.f32 %v1364, %v1955
        %v1957 = vpop.f32.mrb[0].mxu0
        %1958 = vmatprep.mubr.bf16.mxu0 %v1257
        %1959 = vmatmul.mubr.bf16.gmra.mrb[0].mxu0 %v873
        %v1960 = vpop.f32.mrb[0].mxu0
        %v1961 = vadd.f32 %v1364, %v1960
        %v1962 = vpop.f32.mrb[0].mxu0
        %v1963 = vpop.f32.mrb[0].mxu0
        %v1964 = vadd.f32 %v1364, %v1963
        %v1965 = vpop.f32.mrb[0].mxu0
        %1966 = vmatprep.mubr.bf16.mxu0 %v1258
        %1967 = vmatmul.mubr.bf16.gmra.mrb[0].mxu0 %v874
        %v1968 = vpop.f32.mrb[0].mxu0
        %v1969 = vadd.f32 %v1364, %v1968
        %v1970 = vpop.f32.mrb[0].mxu0
        %v1971 = vpop.f32.mrb[0].mxu0
        %v1972 = vadd.f32 %v1364, %v1971
        %v1973 = vpop.f32.mrb[0].mxu0
        %1974 = vmatprep.mubr.bf16.mxu0 %v1259
        %1975 = vmatmul.mubr.bf16.gmra.mrb[0].mxu0 %v875
        %v1976 = vpop.f32.mrb[0].mxu0
        %v1977 = vadd.f32 %v1364, %v1976
        %v1978 = vpop.f32.mrb[0].mxu0
        %v1979 = vpop.f32.mrb[0].mxu0
        %v1980 = vadd.f32 %v1364, %v1979
        %v1981 = vpop.f32.mrb[0].mxu0
        %1982 = vmatprep.mubr.bf16.mxu0 %v1260
        %1983 = vmatmul.mubr.bf16.gmra.mrb[0].mxu0 %v876
        %v1984 = vpop.f32.mrb[0].mxu0
        %v1985 = vadd.f32 %v1364, %v1984
        %v1986 = vpop.f32.mrb[0].mxu0
        %v1987 = vpop.f32.mrb[0].mxu0
        %v1988 = vadd.f32 %v1364, %v1987
        %v1989 = vpop.f32.mrb[0].mxu0
        %1990 = vmatprep.mubr.bf16.mxu0 %v1261
        %1991 = vmatmul.mubr.bf16.gmra.mrb[0].mxu0 %v877
        %v1992 = vpop.f32.mrb[0].mxu0
        %v1993 = vadd.f32 %v1364, %v1992
        %v1994 = vpop.f32.mrb[0].mxu0
        %v1995 = vpop.f32.mrb[0].mxu0
        %v1996 = vadd.f32 %v1364, %v1995
        %v1997 = vpop.f32.mrb[0].mxu0
        %1998 = vmatprep.mubr.bf16.mxu0 %v1262
        %1999 = vmatmul.mubr.bf16.gmra.mrb[0].mxu0 %v878
        %v2000 = vpop.f32.mrb[0].mxu0
        %v2001 = vadd.f32 %v1364, %v2000
        %v2002 = vpop.f32.mrb[0].mxu0
        %v2003 = vpop.f32.mrb[0].mxu0
        %v2004 = vadd.f32 %v1364, %v2003
        %v2005 = vpop.f32.mrb[0].mxu0
        %2006 = vdwg.mxu0
        %v2007 = vmax.f32 %v1497, 0.0
        %v2008 = vmax.f32 %v1500, 0.0
        %v2009 = vmax.f32 %v1505, 0.0
        %v2010 = vmax.f32 %v1508, 0.0
        %v2011 = vmax.f32 %v1513, 0.0
        %v2012 = vmax.f32 %v1516, 0.0
        %v2013 = vmax.f32 %v1521, 0.0
        %v2014 = vmax.f32 %v1524, 0.0
        %v2015 = vmax.f32 %v1529, 0.0
        %v2016 = vmax.f32 %v1532, 0.0
        %v2017 = vmax.f32 %v1537, 0.0
        %v2018 = vmax.f32 %v1540, 0.0
        %v2019 = vmax.f32 %v1545, 0.0
        %v2020 = vmax.f32 %v1548, 0.0
        %v2021 = vmax.f32 %v1553, 0.0
        %v2022 = vmax.f32 %v1556, 0.0
        %v2023 = vmax.f32 %v1561, 0.0
        %v2024 = vmax.f32 %v1564, 0.0
        %v2025 = vmax.f32 %v1569, 0.0
        %v2026 = vmax.f32 %v1572, 0.0
        %v2027 = vmax.f32 %v1577, 0.0
        %v2028 = vmax.f32 %v1580, 0.0
        %v2029 = vmax.f32 %v1585, 0.0
        %v2030 = vmax.f32 %v1588, 0.0
        %v2031 = vmax.f32 %v1593, 0.0
        %v2032 = vmax.f32 %v1596, 0.0
        %v2033 = vmax.f32 %v1601, 0.0
        %v2034 = vmax.f32 %v1604, 0.0
        %v2035 = vmax.f32 %v1609, 0.0
        %v2036 = vmax.f32 %v1612, 0.0
        %v2037 = vmax.f32 %v1617, 0.0
        %v2038 = vmax.f32 %v1620, 0.0
        %v2039 = vmax.f32 %v1625, 0.0
        %v2040 = vmax.f32 %v1628, 0.0
        %v2041 = vmax.f32 %v1633, 0.0
        %v2042 = vmax.f32 %v1636, 0.0
        %v2043 = vmax.f32 %v1641, 0.0
        %v2044 = vmax.f32 %v1644, 0.0
        %v2045 = vmax.f32 %v1649, 0.0
        %v2046 = vmax.f32 %v1652, 0.0
        %v2047 = vmax.f32 %v1657, 0.0
        %v2048 = vmax.f32 %v1660, 0.0
        %v2049 = vmax.f32 %v1665, 0.0
        %v2050 = vmax.f32 %v1668, 0.0
        %v2051 = vmax.f32 %v1673, 0.0
        %v2052 = vmax.f32 %v1676, 0.0
        %v2053 = vmax.f32 %v1681, 0.0
        %v2054 = vmax.f32 %v1684, 0.0
        %v2055 = vmax.f32 %v1689, 0.0
        %v2056 = vmax.f32 %v1692, 0.0
        %v2057 = vmax.f32 %v1697, 0.0
        %v2058 = vmax.f32 %v1700, 0.0
        %v2059 = vmax.f32 %v1705, 0.0
        %v2060 = vmax.f32 %v1708, 0.0
        %v2061 = vmax.f32 %v1713, 0.0
        %v2062 = vmax.f32 %v1716, 0.0
        %v2063 = vmax.f32 %v1721, 0.0
        %v2064 = vmax.f32 %v1724, 0.0
        %v2065 = vmax.f32 %v1729, 0.0
        %v2066 = vmax.f32 %v1732, 0.0
        %v2067 = vmax.f32 %v1737, 0.0
        %v2068 = vmax.f32 %v1740, 0.0
        %v2069 = vmax.f32 %v1745, 0.0
        %v2070 = vmax.f32 %v1748, 0.0
        %v2071 = vmax.f32 %v1753, 0.0
        %v2072 = vmax.f32 %v1756, 0.0
        %v2073 = vmax.f32 %v1761, 0.0
        %v2074 = vmax.f32 %v1764, 0.0
        %v2075 = vmax.f32 %v1769, 0.0
        %v2076 = vmax.f32 %v1772, 0.0
        %v2077 = vmax.f32 %v1777, 0.0
        %v2078 = vmax.f32 %v1780, 0.0
        %v2079 = vmax.f32 %v1785, 0.0
        %v2080 = vmax.f32 %v1788, 0.0
        %v2081 = vmax.f32 %v1793, 0.0
        %v2082 = vmax.f32 %v1796, 0.0
        %v2083 = vmax.f32 %v1801, 0.0
        %v2084 = vmax.f32 %v1804, 0.0
        %v2085 = vmax.f32 %v1809, 0.0
        %v2086 = vmax.f32 %v1812, 0.0
        %v2087 = vmax.f32 %v1817, 0.0
        %v2088 = vmax.f32 %v1820, 0.0
        %v2089 = vmax.f32 %v1825, 0.0
        %v2090 = vmax.f32 %v1828, 0.0
        %v2091 = vmax.f32 %v1833, 0.0
        %v2092 = vmax.f32 %v1836, 0.0
        %v2093 = vmax.f32 %v1841, 0.0
        %v2094 = vmax.f32 %v1844, 0.0
        %v2095 = vmax.f32 %v1849, 0.0
        %v2096 = vmax.f32 %v1852, 0.0
        %v2097 = vmax.f32 %v1857, 0.0
        %v2098 = vmax.f32 %v1860, 0.0
        %v2099 = vmax.f32 %v1865, 0.0
        %v2100 = vmax.f32 %v1868, 0.0
        %v2101 = vmax.f32 %v1873, 0.0
        %v2102 = vmax.f32 %v1876, 0.0
        %v2103 = vmax.f32 %v1881, 0.0
        %v2104 = vmax.f32 %v1884, 0.0
        %v2105 = vmax.f32 %v1889, 0.0
        %v2106 = vmax.f32 %v1892, 0.0
        %v2107 = vmax.f32 %v1897, 0.0
        %v2108 = vmax.f32 %v1900, 0.0
        %v2109 = vmax.f32 %v1905, 0.0
        %v2110 = vmax.f32 %v1908, 0.0
        %v2111 = vmax.f32 %v1913, 0.0
        %v2112 = vmax.f32 %v1916, 0.0
        %v2113 = vmax.f32 %v1921, 0.0
        %v2114 = vmax.f32 %v1924, 0.0
        %v2115 = vmax.f32 %v1929, 0.0
        %v2116 = vmax.f32 %v1932, 0.0
        %v2117 = vmax.f32 %v1937, 0.0
        %v2118 = vmax.f32 %v1940, 0.0
        %v2119 = vmax.f32 %v1945, 0.0
        %v2120 = vmax.f32 %v1948, 0.0
        %v2121 = vmax.f32 %v1953, 0.0
        %v2122 = vmax.f32 %v1956, 0.0
        %v2123 = vmax.f32 %v1961, 0.0
        %v2124 = vmax.f32 %v1964, 0.0
        %v2125 = vmax.f32 %v1969, 0.0
        %v2126 = vmax.f32 %v1972, 0.0
        %v2127 = vmax.f32 %v1977, 0.0
        %v2128 = vmax.f32 %v1980, 0.0
        %v2129 = vmax.f32 %v1985, 0.0
        %v2130 = vmax.f32 %v1988, 0.0
        %v2131 = vmax.f32 %v1993, 0.0
        %v2132 = vmax.f32 %v1996, 0.0
        %v2133 = vmax.f32 %v2001, 0.0
        %v2134 = vmax.f32 %v2004, 0.0
        %v2135 = vpack.c.bf16 %v2008, %v2007
        %v2136 = vpack.c.bf16 %v2010, %v2009
        %v2137 = vpack.c.bf16 %v2012, %v2011
        %v2138 = vpack.c.bf16 %v2014, %v2013
        %v2139 = vpack.c.bf16 %v2016, %v2015
        %v2140 = vpack.c.bf16 %v2018, %v2017
        %v2141 = vpack.c.bf16 %v2020, %v2019
        %v2142 = vpack.c.bf16 %v2022, %v2021
        %v2143 = vpack.c.bf16 %v2024, %v2023
        %v2144 = vpack.c.bf16 %v2026, %v2025
        %v2145 = vpack.c.bf16 %v2028, %v2027
        %v2146 = vpack.c.bf16 %v2030, %v2029
        %v2147 = vpack.c.bf16 %v2032, %v2031
        %v2148 = vpack.c.bf16 %v2034, %v2033
        %v2149 = vpack.c.bf16 %v2036, %v2035
        %v2150 = vpack.c.bf16 %v2038, %v2037
        %v2151 = vpack.c.bf16 %v2040, %v2039
        %v2152 = vpack.c.bf16 %v2042, %v2041
        %v2153 = vpack.c.bf16 %v2044, %v2043
        %v2154 = vpack.c.bf16 %v2046, %v2045
        %v2155 = vpack.c.bf16 %v2048, %v2047
        %v2156 = vpack.c.bf16 %v2050, %v2049
        %v2157 = vpack.c.bf16 %v2052, %v2051
        %v2158 = vpack.c.bf16 %v2054, %v2053
        %v2159 = vpack.c.bf16 %v2056, %v2055
        %v2160 = vpack.c.bf16 %v2058, %v2057
        %v2161 = vpack.c.bf16 %v2060, %v2059
        %v2162 = vpack.c.bf16 %v2062, %v2061
        %v2163 = vpack.c.bf16 %v2064, %v2063
        %v2164 = vpack.c.bf16 %v2066, %v2065
        %v2165 = vpack.c.bf16 %v2068, %v2067
        %v2166 = vpack.c.bf16 %v2070, %v2069
        %v2167 = vpack.c.bf16 %v2072, %v2071
        %v2168 = vpack.c.bf16 %v2074, %v2073
        %v2169 = vpack.c.bf16 %v2076, %v2075
        %v2170 = vpack.c.bf16 %v2078, %v2077
        %v2171 = vpack.c.bf16 %v2080, %v2079
        %v2172 = vpack.c.bf16 %v2082, %v2081
        %v2173 = vpack.c.bf16 %v2084, %v2083
        %v2174 = vpack.c.bf16 %v2086, %v2085
        %v2175 = vpack.c.bf16 %v2088, %v2087
        %v2176 = vpack.c.bf16 %v2090, %v2089
        %v2177 = vpack.c.bf16 %v2092, %v2091
        %v2178 = vpack.c.bf16 %v2094, %v2093
        %v2179 = vpack.c.bf16 %v2096, %v2095
        %v2180 = vpack.c.bf16 %v2098, %v2097
        %v2181 = vpack.c.bf16 %v2100, %v2099
        %v2182 = vpack.c.bf16 %v2102, %v2101
        %v2183 = vpack.c.bf16 %v2104, %v2103
        %v2184 = vpack.c.bf16 %v2106, %v2105
        %v2185 = vpack.c.bf16 %v2108, %v2107
        %v2186 = vpack.c.bf16 %v2110, %v2109
        %v2187 = vpack.c.bf16 %v2112, %v2111
        %v2188 = vpack.c.bf16 %v2114, %v2113
        %v2189 = vpack.c.bf16 %v2116, %v2115
        %v2190 = vpack.c.bf16 %v2118, %v2117
        %v2191 = vpack.c.bf16 %v2120, %v2119
        %v2192 = vpack.c.bf16 %v2122, %v2121
        %v2193 = vpack.c.bf16 %v2124, %v2123
        %v2194 = vpack.c.bf16 %v2126, %v2125
        %v2195 = vpack.c.bf16 %v2128, %v2127
        %v2196 = vpack.c.bf16 %v2130, %v2129
        %v2197 = vpack.c.bf16 %v2132, %v2131
        %v2198 = vpack.c.bf16 %v2134, %v2133
        %v2199 = vld [vmem:[%s4] sm:$0xf]
        %v2200 = vld [vmem:[%s4 + $0x4] sm:$0xf]
        %v2201 = vld [vmem:[%s4 + $0x8] sm:$0xf]
        %v2202 = vld [vmem:[%s4 + $0xc] sm:$0xf]
        %v2203 = vld [vmem:[%s4 + $0x10] sm:$0xf]
        %v2204 = vld [vmem:[%s4 + $0x14] sm:$0xf]
        %v2205 = vld [vmem:[%s4 + $0x18] sm:$0xf]
        %v2206 = vld [vmem:[%s4 + $0x1c] sm:$0xf]
        %v2207 = vld [vmem:[%s4 + $0x20] sm:$0xf]
        %v2208 = vld [vmem:[%s4 + $0x24] sm:$0xf]
        %v2209 = vld [vmem:[%s4 + $0x28] sm:$0xf]
        %v2210 = vld [vmem:[%s4 + $0x2c] sm:$0xf]
        %v2211 = vld [vmem:[%s4 + $0x30] sm:$0xf]
        %v2212 = vld [vmem:[%s4 + $0x34] sm:$0xf]
        %v2213 = vld [vmem:[%s4 + $0x38] sm:$0xf]
        %v2214 = vld [vmem:[%s4 + $0x3c] sm:$0xf]
        %v2231 = vunpack.c.l.b16 %v2199
        %v2232 = vunpack.c.l.b16 %v2200
        %v2233 = vunpack.c.l.b16 %v2201
        %v2234 = vunpack.c.l.b16 %v2202
        %v2235 = vunpack.c.l.b16 %v2203
        %v2236 = vunpack.c.l.b16 %v2204
        %v2237 = vunpack.c.l.b16 %v2205
        %v2238 = vunpack.c.l.b16 %v2206
        %v2239 = vunpack.c.l.b16 %v2207
        %v2240 = vunpack.c.l.b16 %v2208
        %v2241 = vunpack.c.l.b16 %v2209
        %v2242 = vunpack.c.l.b16 %v2210
        %v2243 = vunpack.c.l.b16 %v2211
        %v2244 = vunpack.c.l.b16 %v2212
        %v2245 = vunpack.c.l.b16 %v2213
        %v2246 = vunpack.c.l.b16 %v2214
        %v2247 = vpack.c.b16 %v2232, %v2231
        %v2248 = vpack.c.b16 %v2234, %v2233
        %v2249 = vpack.c.b16 %v2236, %v2235
        %v2250 = vpack.c.b16 %v2238, %v2237
        %v2251 = vpack.c.b16 %v2240, %v2239
        %v2252 = vpack.c.b16 %v2242, %v2241
        %v2253 = vpack.c.b16 %v2244, %v2243
        %v2254 = vpack.c.b16 %v2246, %v2245
        %2263 = vmatprep.subr.bf16.mxu0 0
        %2264 = vmatpush1.bf16.msra.mxu0 %v2247
        %2265 = vmatprep.subr.bf16.mxu0 0
        %2266 = vmatpush1.bf16.msra.mxu0 %v2248
        %2267 = vmatprep.subr.bf16.mxu0 0
        %2268 = vmatpush1.bf16.msra.mxu0 %v2249
        %2269 = vmatprep.subr.bf16.mxu0 0
        %2270 = vmatpush1.bf16.msra.mxu0 %v2250
        %2271 = vmatprep.subr.bf16.mxu0 0
        %2272 = vmatpush1.bf16.msra.mxu0 %v2251
        %2273 = vmatprep.subr.bf16.mxu0 0
        %2274 = vmatpush1.bf16.msra.mxu0 %v2252
        %2275 = vmatprep.subr.bf16.mxu0 0
        %2276 = vmatpush1.bf16.msra.mxu0 %v2253
        %2277 = vmatprep.subr.bf16.mxu0 0
        %2278 = vmatpush1.bf16.msra.mxu0 %v2254
        %2279 = vmatprep.subr.bf16.mxu0 0
        %2280 = vmatpush1.bf16.msra.mxu0 0
        %2281 = vmatprep.subr.bf16.mxu0 0
        %2282 = vmatpush1.bf16.msra.mxu0 0
        %2283 = vmatprep.subr.bf16.mxu0 0
        %2284 = vmatpush1.bf16.msra.mxu0 0
        %2285 = vmatprep.subr.bf16.mxu0 0
        %2286 = vmatpush1.bf16.msra.mxu0 0
        %2287 = vmatprep.subr.bf16.mxu0 0
        %2288 = vmatpush1.bf16.msra.mxu0 0
        %2289 = vmatprep.subr.bf16.mxu0 0
        %2290 = vmatpush1.bf16.msra.mxu0 0
        %2291 = vmatprep.subr.bf16.mxu0 0
        %2292 = vmatpush1.bf16.msra.mxu0 0
        %2293 = vmatprep.subr.bf16.mxu0 0
        %2294 = vmatpush1.bf16.msra.mxu0 0
        %2295 = vmatprep.mubr.bf16.mxu0 0
        %2296 = vmatmul.mubr.bf16.gmra.mrb[0].mxu0 %v2135
        %v2297 = vpop.f32.mrb[0].mxu0
        %v2298 = vadd.f32 0.0, %v2297
        %v2299 = vpop.f32.mrb[0].mxu0
        %v2300 = vpop.f32.mrb[0].mxu0
        %v2301 = vadd.f32 0.0, %v2300
        %v2302 = vpop.f32.mrb[0].mxu0
        %2303 = vmatprep.mubr.bf16.mxu0 0
        %2304 = vmatmul.mubr.bf16.gmra.mrb[0].mxu0 %v2136
        %v2305 = vpop.f32.mrb[0].mxu0
        %v2306 = vadd.f32 0.0, %v2305
        %v2307 = vpop.f32.mrb[0].mxu0
        %v2308 = vpop.f32.mrb[0].mxu0
        %v2309 = vadd.f32 0.0, %v2308
        %v2310 = vpop.f32.mrb[0].mxu0
        %2311 = vmatprep.mubr.bf16.mxu0 0
        %2312 = vmatmul.mubr.bf16.gmra.mrb[0].mxu0 %v2137
        %v2313 = vpop.f32.mrb[0].mxu0
        %v2314 = vadd.f32 0.0, %v2313
        %v2315 = vpop.f32.mrb[0].mxu0
        %v2316 = vpop.f32.mrb[0].mxu0
        %v2317 = vadd.f32 0.0, %v2316
        %v2318 = vpop.f32.mrb[0].mxu0
        %2319 = vmatprep.mubr.bf16.mxu0 0
        %2320 = vmatmul.mubr.bf16.gmra.mrb[0].mxu0 %v2138
        %v2321 = vpop.f32.mrb[0].mxu0
        %v2322 = vadd.f32 0.0, %v2321
        %v2323 = vpop.f32.mrb[0].mxu0
        %v2324 = vpop.f32.mrb[0].mxu0
        %v2325 = vadd.f32 0.0, %v2324
        %v2326 = vpop.f32.mrb[0].mxu0
        %2327 = vmatprep.mubr.bf16.mxu0 0
        %2328 = vmatmul.mubr.bf16.gmra.mrb[0].mxu0 %v2139
        %v2329 = vpop.f32.mrb[0].mxu0
        %v2330 = vadd.f32 0.0, %v2329
        %v2331 = vpop.f32.mrb[0].mxu0
        %v2332 = vpop.f32.mrb[0].mxu0
        %v2333 = vadd.f32 0.0, %v2332
        %v2334 = vpop.f32.mrb[0].mxu0
        %2335 = vmatprep.mubr.bf16.mxu0 0
        %2336 = vmatmul.mubr.bf16.gmra.mrb[0].mxu0 %v2140
        %v2337 = vpop.f32.mrb[0].mxu0
        %v2338 = vadd.f32 0.0, %v2337
        %v2339 = vpop.f32.mrb[0].mxu0
        %v2340 = vpop.f32.mrb[0].mxu0
        %v2341 = vadd.f32 0.0, %v2340
        %v2342 = vpop.f32.mrb[0].mxu0
        %2343 = vmatprep.mubr.bf16.mxu0 0
        %2344 = vmatmul.mubr.bf16.gmra.mrb[0].mxu0 %v2141
        %v2345 = vpop.f32.mrb[0].mxu0
        %v2346 = vadd.f32 0.0, %v2345
        %v2347 = vpop.f32.mrb[0].mxu0
        %v2348 = vpop.f32.mrb[0].mxu0
        %v2349 = vadd.f32 0.0, %v2348
        %v2350 = vpop.f32.mrb[0].mxu0
        %2351 = vmatprep.mubr.bf16.mxu0 0
        %2352 = vmatmul.mubr.bf16.gmra.mrb[0].mxu0 %v2142
        %v2353 = vpop.f32.mrb[0].mxu0
        %v2354 = vadd.f32 0.0, %v2353
        %v2355 = vpop.f32.mrb[0].mxu0
        %v2356 = vpop.f32.mrb[0].mxu0
        %v2357 = vadd.f32 0.0, %v2356
        %v2358 = vpop.f32.mrb[0].mxu0
        %2359 = vmatprep.mubr.bf16.mxu0 0
        %2360 = vmatmul.mubr.bf16.gmra.mrb[0].mxu0 %v2143
        %v2361 = vpop.f32.mrb[0].mxu0
        %v2362 = vadd.f32 0.0, %v2361
        %v2363 = vpop.f32.mrb[0].mxu0
        %v2364 = vpop.f32.mrb[0].mxu0
        %v2365 = vadd.f32 0.0, %v2364
        %v2366 = vpop.f32.mrb[0].mxu0
        %2367 = vmatprep.mubr.bf16.mxu0 0
        %2368 = vmatmul.mubr.bf16.gmra.mrb[0].mxu0 %v2144
        %v2369 = vpop.f32.mrb[0].mxu0
        %v2370 = vadd.f32 0.0, %v2369
        %v2371 = vpop.f32.mrb[0].mxu0
        %v2372 = vpop.f32.mrb[0].mxu0
        %v2373 = vadd.f32 0.0, %v2372
        %v2374 = vpop.f32.mrb[0].mxu0
        %2375 = vmatprep.mubr.bf16.mxu0 0
        %2376 = vmatmul.mubr.bf16.gmra.mrb[0].mxu0 %v2145
        %v2377 = vpop.f32.mrb[0].mxu0
        %v2378 = vadd.f32 0.0, %v2377
        %v2379 = vpop.f32.mrb[0].mxu0
        %v2380 = vpop.f32.mrb[0].mxu0
        %v2381 = vadd.f32 0.0, %v2380
        %v2382 = vpop.f32.mrb[0].mxu0
        %2383 = vmatprep.mubr.bf16.mxu0 0
        %2384 = vmatmul.mubr.bf16.gmra.mrb[0].mxu0 %v2146
        %v2385 = vpop.f32.mrb[0].mxu0
        %v2386 = vadd.f32 0.0, %v2385
        %v2387 = vpop.f32.mrb[0].mxu0
        %v2388 = vpop.f32.mrb[0].mxu0
        %v2389 = vadd.f32 0.0, %v2388
        %v2390 = vpop.f32.mrb[0].mxu0
        %2391 = vmatprep.mubr.bf16.mxu0 0
        %2392 = vmatmul.mubr.bf16.gmra.mrb[0].mxu0 %v2147
        %v2393 = vpop.f32.mrb[0].mxu0
        %v2394 = vadd.f32 0.0, %v2393
        %v2395 = vpop.f32.mrb[0].mxu0
        %v2396 = vpop.f32.mrb[0].mxu0
        %v2397 = vadd.f32 0.0, %v2396
        %v2398 = vpop.f32.mrb[0].mxu0
        %2399 = vmatprep.mubr.bf16.mxu0 0
        %2400 = vmatmul.mubr.bf16.gmra.mrb[0].mxu0 %v2148
        %v2401 = vpop.f32.mrb[0].mxu0
        %v2402 = vadd.f32 0.0, %v2401
        %v2403 = vpop.f32.mrb[0].mxu0
        %v2404 = vpop.f32.mrb[0].mxu0
        %v2405 = vadd.f32 0.0, %v2404
        %v2406 = vpop.f32.mrb[0].mxu0
        %2407 = vmatprep.mubr.bf16.mxu0 0
        %2408 = vmatmul.mubr.bf16.gmra.mrb[0].mxu0 %v2149
        %v2409 = vpop.f32.mrb[0].mxu0
        %v2410 = vadd.f32 0.0, %v2409
        %v2411 = vpop.f32.mrb[0].mxu0
        %v2412 = vpop.f32.mrb[0].mxu0
        %v2413 = vadd.f32 0.0, %v2412
        %v2414 = vpop.f32.mrb[0].mxu0
        %2415 = vmatprep.mubr.bf16.mxu0 0
        %2416 = vmatmul.mubr.bf16.gmra.mrb[0].mxu0 %v2150
        %v2417 = vpop.f32.mrb[0].mxu0
        %v2418 = vadd.f32 0.0, %v2417
        %v2419 = vpop.f32.mrb[0].mxu0
        %v2420 = vpop.f32.mrb[0].mxu0
        %v2421 = vadd.f32 0.0, %v2420
        %v2422 = vpop.f32.mrb[0].mxu0
        %2423 = vmatprep.mubr.bf16.mxu0 0
        %2424 = vmatmul.mubr.bf16.gmra.mrb[0].mxu0 %v2151
        %v2425 = vpop.f32.mrb[0].mxu0
        %v2426 = vadd.f32 0.0, %v2425
        %v2427 = vpop.f32.mrb[0].mxu0
        %v2428 = vpop.f32.mrb[0].mxu0
        %v2429 = vadd.f32 0.0, %v2428
        %v2430 = vpop.f32.mrb[0].mxu0
        %2431 = vmatprep.mubr.bf16.mxu0 0
        %2432 = vmatmul.mubr.bf16.gmra.mrb[0].mxu0 %v2152
        %v2433 = vpop.f32.mrb[0].mxu0
        %v2434 = vadd.f32 0.0, %v2433
        %v2435 = vpop.f32.mrb[0].mxu0
        %v2436 = vpop.f32.mrb[0].mxu0
        %v2437 = vadd.f32 0.0, %v2436
        %v2438 = vpop.f32.mrb[0].mxu0
        %2439 = vmatprep.mubr.bf16.mxu0 0
        %2440 = vmatmul.mubr.bf16.gmra.mrb[0].mxu0 %v2153
        %v2441 = vpop.f32.mrb[0].mxu0
        %v2442 = vadd.f32 0.0, %v2441
        %v2443 = vpop.f32.mrb[0].mxu0
        %v2444 = vpop.f32.mrb[0].mxu0
        %v2445 = vadd.f32 0.0, %v2444
        %v2446 = vpop.f32.mrb[0].mxu0
        %2447 = vmatprep.mubr.bf16.mxu0 0
        %2448 = vmatmul.mubr.bf16.gmra.mrb[0].mxu0 %v2154
        %v2449 = vpop.f32.mrb[0].mxu0
        %v2450 = vadd.f32 0.0, %v2449
        %v2451 = vpop.f32.mrb[0].mxu0
        %v2452 = vpop.f32.mrb[0].mxu0
        %v2453 = vadd.f32 0.0, %v2452
        %v2454 = vpop.f32.mrb[0].mxu0
        %2455 = vmatprep.mubr.bf16.mxu0 0
        %2456 = vmatmul.mubr.bf16.gmra.mrb[0].mxu0 %v2155
        %v2457 = vpop.f32.mrb[0].mxu0
        %v2458 = vadd.f32 0.0, %v2457
        %v2459 = vpop.f32.mrb[0].mxu0
        %v2460 = vpop.f32.mrb[0].mxu0
        %v2461 = vadd.f32 0.0, %v2460
        %v2462 = vpop.f32.mrb[0].mxu0
        %2463 = vmatprep.mubr.bf16.mxu0 0
        %2464 = vmatmul.mubr.bf16.gmra.mrb[0].mxu0 %v2156
        %v2465 = vpop.f32.mrb[0].mxu0
        %v2466 = vadd.f32 0.0, %v2465
        %v2467 = vpop.f32.mrb[0].mxu0
        %v2468 = vpop.f32.mrb[0].mxu0
        %v2469 = vadd.f32 0.0, %v2468
        %v2470 = vpop.f32.mrb[0].mxu0
        %2471 = vmatprep.mubr.bf16.mxu0 0
        %2472 = vmatmul.mubr.bf16.gmra.mrb[0].mxu0 %v2157
        %v2473 = vpop.f32.mrb[0].mxu0
        %v2474 = vadd.f32 0.0, %v2473
        %v2475 = vpop.f32.mrb[0].mxu0
        %v2476 = vpop.f32.mrb[0].mxu0
        %v2477 = vadd.f32 0.0, %v2476
        %v2478 = vpop.f32.mrb[0].mxu0
        %2479 = vmatprep.mubr.bf16.mxu0 0
        %2480 = vmatmul.mubr.bf16.gmra.mrb[0].mxu0 %v2158
        %v2481 = vpop.f32.mrb[0].mxu0
        %v2482 = vadd.f32 0.0, %v2481
        %v2483 = vpop.f32.mrb[0].mxu0
        %v2484 = vpop.f32.mrb[0].mxu0
        %v2485 = vadd.f32 0.0, %v2484
        %v2486 = vpop.f32.mrb[0].mxu0
        %2487 = vmatprep.mubr.bf16.mxu0 0
        %2488 = vmatmul.mubr.bf16.gmra.mrb[0].mxu0 %v2159
        %v2489 = vpop.f32.mrb[0].mxu0
        %v2490 = vadd.f32 0.0, %v2489
        %v2491 = vpop.f32.mrb[0].mxu0
        %v2492 = vpop.f32.mrb[0].mxu0
        %v2493 = vadd.f32 0.0, %v2492
        %v2494 = vpop.f32.mrb[0].mxu0
        %2495 = vmatprep.mubr.bf16.mxu0 0
        %2496 = vmatmul.mubr.bf16.gmra.mrb[0].mxu0 %v2160
        %v2497 = vpop.f32.mrb[0].mxu0
        %v2498 = vadd.f32 0.0, %v2497
        %v2499 = vpop.f32.mrb[0].mxu0
        %v2500 = vpop.f32.mrb[0].mxu0
        %v2501 = vadd.f32 0.0, %v2500
        %v2502 = vpop.f32.mrb[0].mxu0
        %2503 = vmatprep.mubr.bf16.mxu0 0
        %2504 = vmatmul.mubr.bf16.gmra.mrb[0].mxu0 %v2161
        %v2505 = vpop.f32.mrb[0].mxu0
        %v2506 = vadd.f32 0.0, %v2505
        %v2507 = vpop.f32.mrb[0].mxu0
        %v2508 = vpop.f32.mrb[0].mxu0
        %v2509 = vadd.f32 0.0, %v2508
        %v2510 = vpop.f32.mrb[0].mxu0
        %2511 = vmatprep.mubr.bf16.mxu0 0
        %2512 = vmatmul.mubr.bf16.gmra.mrb[0].mxu0 %v2162
        %v2513 = vpop.f32.mrb[0].mxu0
        %v2514 = vadd.f32 0.0, %v2513
        %v2515 = vpop.f32.mrb[0].mxu0
        %v2516 = vpop.f32.mrb[0].mxu0
        %v2517 = vadd.f32 0.0, %v2516
        %v2518 = vpop.f32.mrb[0].mxu0
        %2519 = vmatprep.mubr.bf16.mxu0 0
        %2520 = vmatmul.mubr.bf16.gmra.mrb[0].mxu0 %v2163
        %v2521 = vpop.f32.mrb[0].mxu0
        %v2522 = vadd.f32 0.0, %v2521
        %v2523 = vpop.f32.mrb[0].mxu0
        %v2524 = vpop.f32.mrb[0].mxu0
        %v2525 = vadd.f32 0.0, %v2524
        %v2526 = vpop.f32.mrb[0].mxu0
        %2527 = vmatprep.mubr.bf16.mxu0 0
        %2528 = vmatmul.mubr.bf16.gmra.mrb[0].mxu0 %v2164
        %v2529 = vpop.f32.mrb[0].mxu0
        %v2530 = vadd.f32 0.0, %v2529
        %v2531 = vpop.f32.mrb[0].mxu0
        %v2532 = vpop.f32.mrb[0].mxu0
        %v2533 = vadd.f32 0.0, %v2532
        %v2534 = vpop.f32.mrb[0].mxu0
        %2535 = vmatprep.mubr.bf16.mxu0 0
        %2536 = vmatmul.mubr.bf16.gmra.mrb[0].mxu0 %v2165
        %v2537 = vpop.f32.mrb[0].mxu0
        %v2538 = vadd.f32 0.0, %v2537
        %v2539 = vpop.f32.mrb[0].mxu0
        %v2540 = vpop.f32.mrb[0].mxu0
        %v2541 = vadd.f32 0.0, %v2540
        %v2542 = vpop.f32.mrb[0].mxu0
        %2543 = vmatprep.mubr.bf16.mxu0 0
        %2544 = vmatmul.mubr.bf16.gmra.mrb[0].mxu0 %v2166
        %v2545 = vpop.f32.mrb[0].mxu0
        %v2546 = vadd.f32 0.0, %v2545
        %v2547 = vpop.f32.mrb[0].mxu0
        %v2548 = vpop.f32.mrb[0].mxu0
        %v2549 = vadd.f32 0.0, %v2548
        %v2550 = vpop.f32.mrb[0].mxu0
        %2551 = vmatprep.mubr.bf16.mxu0 0
        %2552 = vmatmul.mubr.bf16.gmra.mrb[0].mxu0 %v2167
        %v2553 = vpop.f32.mrb[0].mxu0
        %v2554 = vadd.f32 0.0, %v2553
        %v2555 = vpop.f32.mrb[0].mxu0
        %v2556 = vpop.f32.mrb[0].mxu0
        %v2557 = vadd.f32 0.0, %v2556
        %v2558 = vpop.f32.mrb[0].mxu0
        %2559 = vmatprep.mubr.bf16.mxu0 0
        %2560 = vmatmul.mubr.bf16.gmra.mrb[0].mxu0 %v2168
        %v2561 = vpop.f32.mrb[0].mxu0
        %v2562 = vadd.f32 0.0, %v2561
        %v2563 = vpop.f32.mrb[0].mxu0
        %v2564 = vpop.f32.mrb[0].mxu0
        %v2565 = vadd.f32 0.0, %v2564
        %v2566 = vpop.f32.mrb[0].mxu0
        %2567 = vmatprep.mubr.bf16.mxu0 0
        %2568 = vmatmul.mubr.bf16.gmra.mrb[0].mxu0 %v2169
        %v2569 = vpop.f32.mrb[0].mxu0
        %v2570 = vadd.f32 0.0, %v2569
        %v2571 = vpop.f32.mrb[0].mxu0
        %v2572 = vpop.f32.mrb[0].mxu0
        %v2573 = vadd.f32 0.0, %v2572
        %v2574 = vpop.f32.mrb[0].mxu0
        %2575 = vmatprep.mubr.bf16.mxu0 0
        %2576 = vmatmul.mubr.bf16.gmra.mrb[0].mxu0 %v2170
        %v2577 = vpop.f32.mrb[0].mxu0
        %v2578 = vadd.f32 0.0, %v2577
        %v2579 = vpop.f32.mrb[0].mxu0
        %v2580 = vpop.f32.mrb[0].mxu0
        %v2581 = vadd.f32 0.0, %v2580
        %v2582 = vpop.f32.mrb[0].mxu0
        %2583 = vmatprep.mubr.bf16.mxu0 0
        %2584 = vmatmul.mubr.bf16.gmra.mrb[0].mxu0 %v2171
        %v2585 = vpop.f32.mrb[0].mxu0
        %v2586 = vadd.f32 0.0, %v2585
        %v2587 = vpop.f32.mrb[0].mxu0
        %v2588 = vpop.f32.mrb[0].mxu0
        %v2589 = vadd.f32 0.0, %v2588
        %v2590 = vpop.f32.mrb[0].mxu0
        %2591 = vmatprep.mubr.bf16.mxu0 0
        %2592 = vmatmul.mubr.bf16.gmra.mrb[0].mxu0 %v2172
        %v2593 = vpop.f32.mrb[0].mxu0
        %v2594 = vadd.f32 0.0, %v2593
        %v2595 = vpop.f32.mrb[0].mxu0
        %v2596 = vpop.f32.mrb[0].mxu0
        %v2597 = vadd.f32 0.0, %v2596
        %v2598 = vpop.f32.mrb[0].mxu0
        %2599 = vmatprep.mubr.bf16.mxu0 0
        %2600 = vmatmul.mubr.bf16.gmra.mrb[0].mxu0 %v2173
        %v2601 = vpop.f32.mrb[0].mxu0
        %v2602 = vadd.f32 0.0, %v2601
        %v2603 = vpop.f32.mrb[0].mxu0
        %v2604 = vpop.f32.mrb[0].mxu0
        %v2605 = vadd.f32 0.0, %v2604
        %v2606 = vpop.f32.mrb[0].mxu0
        %2607 = vmatprep.mubr.bf16.mxu0 0
        %2608 = vmatmul.mubr.bf16.gmra.mrb[0].mxu0 %v2174
        %v2609 = vpop.f32.mrb[0].mxu0
        %v2610 = vadd.f32 0.0, %v2609
        %v2611 = vpop.f32.mrb[0].mxu0
        %v2612 = vpop.f32.mrb[0].mxu0
        %v2613 = vadd.f32 0.0, %v2612
        %v2614 = vpop.f32.mrb[0].mxu0
        %2615 = vmatprep.mubr.bf16.mxu0 0
        %2616 = vmatmul.mubr.bf16.gmra.mrb[0].mxu0 %v2175
        %v2617 = vpop.f32.mrb[0].mxu0
        %v2618 = vadd.f32 0.0, %v2617
        %v2619 = vpop.f32.mrb[0].mxu0
        %v2620 = vpop.f32.mrb[0].mxu0
        %v2621 = vadd.f32 0.0, %v2620
        %v2622 = vpop.f32.mrb[0].mxu0
        %2623 = vmatprep.mubr.bf16.mxu0 0
        %2624 = vmatmul.mubr.bf16.gmra.mrb[0].mxu0 %v2176
        %v2625 = vpop.f32.mrb[0].mxu0
        %v2626 = vadd.f32 0.0, %v2625
        %v2627 = vpop.f32.mrb[0].mxu0
        %v2628 = vpop.f32.mrb[0].mxu0
        %v2629 = vadd.f32 0.0, %v2628
        %v2630 = vpop.f32.mrb[0].mxu0
        %2631 = vmatprep.mubr.bf16.mxu0 0
        %2632 = vmatmul.mubr.bf16.gmra.mrb[0].mxu0 %v2177
        %v2633 = vpop.f32.mrb[0].mxu0
        %v2634 = vadd.f32 0.0, %v2633
        %v2635 = vpop.f32.mrb[0].mxu0
        %v2636 = vpop.f32.mrb[0].mxu0
        %v2637 = vadd.f32 0.0, %v2636
        %v2638 = vpop.f32.mrb[0].mxu0
        %2639 = vmatprep.mubr.bf16.mxu0 0
        %2640 = vmatmul.mubr.bf16.gmra.mrb[0].mxu0 %v2178
        %v2641 = vpop.f32.mrb[0].mxu0
        %v2642 = vadd.f32 0.0, %v2641
        %v2643 = vpop.f32.mrb[0].mxu0
        %v2644 = vpop.f32.mrb[0].mxu0
        %v2645 = vadd.f32 0.0, %v2644
        %v2646 = vpop.f32.mrb[0].mxu0
        %2647 = vmatprep.mubr.bf16.mxu0 0
        %2648 = vmatmul.mubr.bf16.gmra.mrb[0].mxu0 %v2179
        %v2649 = vpop.f32.mrb[0].mxu0
        %v2650 = vadd.f32 0.0, %v2649
        %v2651 = vpop.f32.mrb[0].mxu0
        %v2652 = vpop.f32.mrb[0].mxu0
        %v2653 = vadd.f32 0.0, %v2652
        %v2654 = vpop.f32.mrb[0].mxu0
        %2655 = vmatprep.mubr.bf16.mxu0 0
        %2656 = vmatmul.mubr.bf16.gmra.mrb[0].mxu0 %v2180
        %v2657 = vpop.f32.mrb[0].mxu0
        %v2658 = vadd.f32 0.0, %v2657
        %v2659 = vpop.f32.mrb[0].mxu0
        %v2660 = vpop.f32.mrb[0].mxu0
        %v2661 = vadd.f32 0.0, %v2660
        %v2662 = vpop.f32.mrb[0].mxu0
        %2663 = vmatprep.mubr.bf16.mxu0 0
        %2664 = vmatmul.mubr.bf16.gmra.mrb[0].mxu0 %v2181
        %v2665 = vpop.f32.mrb[0].mxu0
        %v2666 = vadd.f32 0.0, %v2665
        %v2667 = vpop.f32.mrb[0].mxu0
        %v2668 = vpop.f32.mrb[0].mxu0
        %v2669 = vadd.f32 0.0, %v2668
        %v2670 = vpop.f32.mrb[0].mxu0
        %2671 = vmatprep.mubr.bf16.mxu0 0
        %2672 = vmatmul.mubr.bf16.gmra.mrb[0].mxu0 %v2182
        %v2673 = vpop.f32.mrb[0].mxu0
        %v2674 = vadd.f32 0.0, %v2673
        %v2675 = vpop.f32.mrb[0].mxu0
        %v2676 = vpop.f32.mrb[0].mxu0
        %v2677 = vadd.f32 0.0, %v2676
        %v2678 = vpop.f32.mrb[0].mxu0
        %2679 = vmatprep.mubr.bf16.mxu0 0
        %2680 = vmatmul.mubr.bf16.gmra.mrb[0].mxu0 %v2183
        %v2681 = vpop.f32.mrb[0].mxu0
        %v2682 = vadd.f32 0.0, %v2681
        %v2683 = vpop.f32.mrb[0].mxu0
        %v2684 = vpop.f32.mrb[0].mxu0
        %v2685 = vadd.f32 0.0, %v2684
        %v2686 = vpop.f32.mrb[0].mxu0
        %2687 = vmatprep.mubr.bf16.mxu0 0
        %2688 = vmatmul.mubr.bf16.gmra.mrb[0].mxu0 %v2184
        %v2689 = vpop.f32.mrb[0].mxu0
        %v2690 = vadd.f32 0.0, %v2689
        %v2691 = vpop.f32.mrb[0].mxu0
        %v2692 = vpop.f32.mrb[0].mxu0
        %v2693 = vadd.f32 0.0, %v2692
        %v2694 = vpop.f32.mrb[0].mxu0
        %2695 = vmatprep.mubr.bf16.mxu0 0
        %2696 = vmatmul.mubr.bf16.gmra.mrb[0].mxu0 %v2185
        %v2697 = vpop.f32.mrb[0].mxu0
        %v2698 = vadd.f32 0.0, %v2697
        %v2699 = vpop.f32.mrb[0].mxu0
        %v2700 = vpop.f32.mrb[0].mxu0
        %v2701 = vadd.f32 0.0, %v2700
        %v2702 = vpop.f32.mrb[0].mxu0
        %2703 = vmatprep.mubr.bf16.mxu0 0
        %2704 = vmatmul.mubr.bf16.gmra.mrb[0].mxu0 %v2186
        %v2705 = vpop.f32.mrb[0].mxu0
        %v2706 = vadd.f32 0.0, %v2705
        %v2707 = vpop.f32.mrb[0].mxu0
        %v2708 = vpop.f32.mrb[0].mxu0
        %v2709 = vadd.f32 0.0, %v2708
        %v2710 = vpop.f32.mrb[0].mxu0
        %2711 = vmatprep.mubr.bf16.mxu0 0
        %2712 = vmatmul.mubr.bf16.gmra.mrb[0].mxu0 %v2187
        %v2713 = vpop.f32.mrb[0].mxu0
        %v2714 = vadd.f32 0.0, %v2713
        %v2715 = vpop.f32.mrb[0].mxu0
        %v2716 = vpop.f32.mrb[0].mxu0
        %v2717 = vadd.f32 0.0, %v2716
        %v2718 = vpop.f32.mrb[0].mxu0
        %2719 = vmatprep.mubr.bf16.mxu0 0
        %2720 = vmatmul.mubr.bf16.gmra.mrb[0].mxu0 %v2188
        %v2721 = vpop.f32.mrb[0].mxu0
        %v2722 = vadd.f32 0.0, %v2721
        %v2723 = vpop.f32.mrb[0].mxu0
        %v2724 = vpop.f32.mrb[0].mxu0
        %v2725 = vadd.f32 0.0, %v2724
        %v2726 = vpop.f32.mrb[0].mxu0
        %2727 = vmatprep.mubr.bf16.mxu0 0
        %2728 = vmatmul.mubr.bf16.gmra.mrb[0].mxu0 %v2189
        %v2729 = vpop.f32.mrb[0].mxu0
        %v2730 = vadd.f32 0.0, %v2729
        %v2731 = vpop.f32.mrb[0].mxu0
        %v2732 = vpop.f32.mrb[0].mxu0
        %v2733 = vadd.f32 0.0, %v2732
        %v2734 = vpop.f32.mrb[0].mxu0
        %2735 = vmatprep.mubr.bf16.mxu0 0
        %2736 = vmatmul.mubr.bf16.gmra.mrb[0].mxu0 %v2190
        %v2737 = vpop.f32.mrb[0].mxu0
        %v2738 = vadd.f32 0.0, %v2737
        %v2739 = vpop.f32.mrb[0].mxu0
        %v2740 = vpop.f32.mrb[0].mxu0
        %v2741 = vadd.f32 0.0, %v2740
        %v2742 = vpop.f32.mrb[0].mxu0
        %2743 = vmatprep.mubr.bf16.mxu0 0
        %2744 = vmatmul.mubr.bf16.gmra.mrb[0].mxu0 %v2191
        %v2745 = vpop.f32.mrb[0].mxu0
        %v2746 = vadd.f32 0.0, %v2745
        %v2747 = vpop.f32.mrb[0].mxu0
        %v2748 = vpop.f32.mrb[0].mxu0
        %v2749 = vadd.f32 0.0, %v2748
        %v2750 = vpop.f32.mrb[0].mxu0
        %2751 = vmatprep.mubr.bf16.mxu0 0
        %2752 = vmatmul.mubr.bf16.gmra.mrb[0].mxu0 %v2192
        %v2753 = vpop.f32.mrb[0].mxu0
        %v2754 = vadd.f32 0.0, %v2753
        %v2755 = vpop.f32.mrb[0].mxu0
        %v2756 = vpop.f32.mrb[0].mxu0
        %v2757 = vadd.f32 0.0, %v2756
        %v2758 = vpop.f32.mrb[0].mxu0
        %2759 = vmatprep.mubr.bf16.mxu0 0
        %2760 = vmatmul.mubr.bf16.gmra.mrb[0].mxu0 %v2193
        %v2761 = vpop.f32.mrb[0].mxu0
        %v2762 = vadd.f32 0.0, %v2761
        %v2763 = vpop.f32.mrb[0].mxu0
        %v2764 = vpop.f32.mrb[0].mxu0
        %v2765 = vadd.f32 0.0, %v2764
        %v2766 = vpop.f32.mrb[0].mxu0
        %2767 = vmatprep.mubr.bf16.mxu0 0
        %2768 = vmatmul.mubr.bf16.gmra.mrb[0].mxu0 %v2194
        %v2769 = vpop.f32.mrb[0].mxu0
        %v2770 = vadd.f32 0.0, %v2769
        %v2771 = vpop.f32.mrb[0].mxu0
        %v2772 = vpop.f32.mrb[0].mxu0
        %v2773 = vadd.f32 0.0, %v2772
        %v2774 = vpop.f32.mrb[0].mxu0
        %2775 = vmatprep.mubr.bf16.mxu0 0
        %2776 = vmatmul.mubr.bf16.gmra.mrb[0].mxu0 %v2195
        %v2777 = vpop.f32.mrb[0].mxu0
        %v2778 = vadd.f32 0.0, %v2777
        %v2779 = vpop.f32.mrb[0].mxu0
        %v2780 = vpop.f32.mrb[0].mxu0
        %v2781 = vadd.f32 0.0, %v2780
        %v2782 = vpop.f32.mrb[0].mxu0
        %2783 = vmatprep.mubr.bf16.mxu0 0
        %2784 = vmatmul.mubr.bf16.gmra.mrb[0].mxu0 %v2196
        %v2785 = vpop.f32.mrb[0].mxu0
        %v2786 = vadd.f32 0.0, %v2785
        %v2787 = vpop.f32.mrb[0].mxu0
        %v2788 = vpop.f32.mrb[0].mxu0
        %v2789 = vadd.f32 0.0, %v2788
        %v2790 = vpop.f32.mrb[0].mxu0
        %2791 = vmatprep.mubr.bf16.mxu0 0
        %2792 = vmatmul.mubr.bf16.gmra.mrb[0].mxu0 %v2197
        %v2793 = vpop.f32.mrb[0].mxu0
        %v2794 = vadd.f32 0.0, %v2793
        %v2795 = vpop.f32.mrb[0].mxu0
        %v2796 = vpop.f32.mrb[0].mxu0
        %v2797 = vadd.f32 0.0, %v2796
        %v2798 = vpop.f32.mrb[0].mxu0
        %2799 = vmatprep.mubr.bf16.mxu0 0
        %2800 = vmatmul.mubr.bf16.gmra.mrb[0].mxu0 %v2198
        %v2801 = vpop.f32.mrb[0].mxu0
        %v2802 = vadd.f32 0.0, %v2801
        %v2803 = vpop.f32.mrb[0].mxu0
        %v2804 = vpop.f32.mrb[0].mxu0
        %v2805 = vadd.f32 0.0, %v2804
        %v2806 = vpop.f32.mrb[0].mxu0
        %2807 = vdwg.mxu0
        %vm2808 = vcmask 7168
        %2809 = vst.msk [vmem:[%s300] sm:$0xff] %vm2808, %v2298
        %2810 = vst.msk [vmem:[%s300 + $0x8] sm:$0xff] %vm2808, %v2301
        %2811 = vst.msk [vmem:[%s300 + $0x10] sm:$0xff] %vm2808, %v2306
        %2812 = vst.msk [vmem:[%s300 + $0x18] sm:$0xff] %vm2808, %v2309
        %2813 = vst.msk [vmem:[%s300 + $0x20] sm:$0xff] %vm2808, %v2314
        %2814 = vst.msk [vmem:[%s300 + $0x28] sm:$0xff] %vm2808, %v2317
        %2815 = vst.msk [vmem:[%s300 + $0x30] sm:$0xff] %vm2808, %v2322
        %2816 = vst.msk [vmem:[%s300 + $0x38] sm:$0xff] %vm2808, %v2325
        %2817 = vst.msk [vmem:[%s300 + $0x40] sm:$0xff] %vm2808, %v2330
        %2818 = vst.msk [vmem:[%s300 + $0x48] sm:$0xff] %vm2808, %v2333
        %2819 = vst.msk [vmem:[%s300 + $0x50] sm:$0xff] %vm2808, %v2338
        %2820 = vst.msk [vmem:[%s300 + $0x58] sm:$0xff] %vm2808, %v2341
        %2821 = vst.msk [vmem:[%s300 + $0x60] sm:$0xff] %vm2808, %v2346
        %2822 = vst.msk [vmem:[%s300 + $0x68] sm:$0xff] %vm2808, %v2349
        %2823 = vst.msk [vmem:[%s300 + $0x70] sm:$0xff] %vm2808, %v2354
        %2824 = vst.msk [vmem:[%s300 + $0x78] sm:$0xff] %vm2808, %v2357
        %2825 = vst.msk [vmem:[%s300 + $0x80] sm:$0xff] %vm2808, %v2362
        %2826 = vst.msk [vmem:[%s300 + $0x88] sm:$0xff] %vm2808, %v2365
        %2827 = vst.msk [vmem:[%s300 + $0x90] sm:$0xff] %vm2808, %v2370
        %2828 = vst.msk [vmem:[%s300 + $0x98] sm:$0xff] %vm2808, %v2373
        %2829 = vst.msk [vmem:[%s300 + $0xa0] sm:$0xff] %vm2808, %v2378
        %2830 = vst.msk [vmem:[%s300 + $0xa8] sm:$0xff] %vm2808, %v2381
        %2831 = vst.msk [vmem:[%s300 + $0xb0] sm:$0xff] %vm2808, %v2386
        %2832 = vst.msk [vmem:[%s300 + $0xb8] sm:$0xff] %vm2808, %v2389
        %2833 = vst.msk [vmem:[%s300 + $0xc0] sm:$0xff] %vm2808, %v2394
        %2834 = vst.msk [vmem:[%s300 + $0xc8] sm:$0xff] %vm2808, %v2397
        %2835 = vst.msk [vmem:[%s300 + $0xd0] sm:$0xff] %vm2808, %v2402
        %2836 = vst.msk [vmem:[%s300 + $0xd8] sm:$0xff] %vm2808, %v2405
        %2837 = vst.msk [vmem:[%s300 + $0xe0] sm:$0xff] %vm2808, %v2410
        %2838 = vst.msk [vmem:[%s300 + $0xe8] sm:$0xff] %vm2808, %v2413
        %2839 = vst.msk [vmem:[%s300 + $0xf0] sm:$0xff] %vm2808, %v2418
        %2840 = vst.msk [vmem:[%s300 + $0xf8] sm:$0xff] %vm2808, %v2421
        %2841 = vst.msk [vmem:[%s300 + $0x100] sm:$0xff] %vm2808, %v2426
        %2842 = vst.msk [vmem:[%s300 + $0x108] sm:$0xff] %vm2808, %v2429
        %2843 = vst.msk [vmem:[%s300 + $0x110] sm:$0xff] %vm2808, %v2434
        %2844 = vst.msk [vmem:[%s300 + $0x118] sm:$0xff] %vm2808, %v2437
        %2845 = vst.msk [vmem:[%s300 + $0x120] sm:$0xff] %vm2808, %v2442
        %2846 = vst.msk [vmem:[%s300 + $0x128] sm:$0xff] %vm2808, %v2445
        %2847 = vst.msk [vmem:[%s300 + $0x130] sm:$0xff] %vm2808, %v2450
        %2848 = vst.msk [vmem:[%s300 + $0x138] sm:$0xff] %vm2808, %v2453
        %2849 = vst.msk [vmem:[%s300 + $0x140] sm:$0xff] %vm2808, %v2458
        %2850 = vst.msk [vmem:[%s300 + $0x148] sm:$0xff] %vm2808, %v2461
        %2851 = vst.msk [vmem:[%s300 + $0x150] sm:$0xff] %vm2808, %v2466
        %2852 = vst.msk [vmem:[%s300 + $0x158] sm:$0xff] %vm2808, %v2469
        %2853 = vst.msk [vmem:[%s300 + $0x160] sm:$0xff] %vm2808, %v2474
        %2854 = vst.msk [vmem:[%s300 + $0x168] sm:$0xff] %vm2808, %v2477
        %2855 = vst.msk [vmem:[%s300 + $0x170] sm:$0xff] %vm2808, %v2482
        %2856 = vst.msk [vmem:[%s300 + $0x178] sm:$0xff] %vm2808, %v2485
        %2857 = vst.msk [vmem:[%s300 + $0x180] sm:$0xff] %vm2808, %v2490
        %2858 = vst.msk [vmem:[%s300 + $0x188] sm:$0xff] %vm2808, %v2493
        %2859 = vst.msk [vmem:[%s300 + $0x190] sm:$0xff] %vm2808, %v2498
        %2860 = vst.msk [vmem:[%s300 + $0x198] sm:$0xff] %vm2808, %v2501
        %2861 = vst.msk [vmem:[%s300 + $0x1a0] sm:$0xff] %vm2808, %v2506
        %2862 = vst.msk [vmem:[%s300 + $0x1a8] sm:$0xff] %vm2808, %v2509
        %2863 = vst.msk [vmem:[%s300 + $0x1b0] sm:$0xff] %vm2808, %v2514
        %2864 = vst.msk [vmem:[%s300 + $0x1b8] sm:$0xff] %vm2808, %v2517
        %2865 = vst.msk [vmem:[%s300 + $0x1c0] sm:$0xff] %vm2808, %v2522
        %2866 = vst.msk [vmem:[%s300 + $0x1c8] sm:$0xff] %vm2808, %v2525
        %2867 = vst.msk [vmem:[%s300 + $0x1d0] sm:$0xff] %vm2808, %v2530
        %2868 = vst.msk [vmem:[%s300 + $0x1d8] sm:$0xff] %vm2808, %v2533
        %2869 = vst.msk [vmem:[%s300 + $0x1e0] sm:$0xff] %vm2808, %v2538
        %2870 = vst.msk [vmem:[%s300 + $0x1e8] sm:$0xff] %vm2808, %v2541
        %2871 = vst.msk [vmem:[%s300 + $0x1f0] sm:$0xff] %vm2808, %v2546
        %2872 = vst.msk [vmem:[%s300 + $0x1f8] sm:$0xff] %vm2808, %v2549
        %2873 = vst.msk [vmem:[%s300 + $0x200] sm:$0xff] %vm2808, %v2554
        %2874 = vst.msk [vmem:[%s300 + $0x208] sm:$0xff] %vm2808, %v2557
        %2875 = vst.msk [vmem:[%s300 + $0x210] sm:$0xff] %vm2808, %v2562
        %2876 = vst.msk [vmem:[%s300 + $0x218] sm:$0xff] %vm2808, %v2565
        %2877 = vst.msk [vmem:[%s300 + $0x220] sm:$0xff] %vm2808, %v2570
        %2878 = vst.msk [vmem:[%s300 + $0x228] sm:$0xff] %vm2808, %v2573
        %2879 = vst.msk [vmem:[%s300 + $0x230] sm:$0xff] %vm2808, %v2578
        %2880 = vst.msk [vmem:[%s300 + $0x238] sm:$0xff] %vm2808, %v2581
        %2881 = vst.msk [vmem:[%s300 + $0x240] sm:$0xff] %vm2808, %v2586
        %2882 = vst.msk [vmem:[%s300 + $0x248] sm:$0xff] %vm2808, %v2589
        %2883 = vst.msk [vmem:[%s300 + $0x250] sm:$0xff] %vm2808, %v2594
        %2884 = vst.msk [vmem:[%s300 + $0x258] sm:$0xff] %vm2808, %v2597
        %2885 = vst.msk [vmem:[%s300 + $0x260] sm:$0xff] %vm2808, %v2602
        %2886 = vst.msk [vmem:[%s300 + $0x268] sm:$0xff] %vm2808, %v2605
        %2887 = vst.msk [vmem:[%s300 + $0x270] sm:$0xff] %vm2808, %v2610
        %2888 = vst.msk [vmem:[%s300 + $0x278] sm:$0xff] %vm2808, %v2613
        %2889 = vst.msk [vmem:[%s300 + $0x280] sm:$0xff] %vm2808, %v2618
        %2890 = vst.msk [vmem:[%s300 + $0x288] sm:$0xff] %vm2808, %v2621
        %2891 = vst.msk [vmem:[%s300 + $0x290] sm:$0xff] %vm2808, %v2626
        %2892 = vst.msk [vmem:[%s300 + $0x298] sm:$0xff] %vm2808, %v2629
        %2893 = vst.msk [vmem:[%s300 + $0x2a0] sm:$0xff] %vm2808, %v2634
        %2894 = vst.msk [vmem:[%s300 + $0x2a8] sm:$0xff] %vm2808, %v2637
        %2895 = vst.msk [vmem:[%s300 + $0x2b0] sm:$0xff] %vm2808, %v2642
        %2896 = vst.msk [vmem:[%s300 + $0x2b8] sm:$0xff] %vm2808, %v2645
        %2897 = vst.msk [vmem:[%s300 + $0x2c0] sm:$0xff] %vm2808, %v2650
        %2898 = vst.msk [vmem:[%s300 + $0x2c8] sm:$0xff] %vm2808, %v2653
        %2899 = vst.msk [vmem:[%s300 + $0x2d0] sm:$0xff] %vm2808, %v2658
        %2900 = vst.msk [vmem:[%s300 + $0x2d8] sm:$0xff] %vm2808, %v2661
        %2901 = vst.msk [vmem:[%s300 + $0x2e0] sm:$0xff] %vm2808, %v2666
        %2902 = vst.msk [vmem:[%s300 + $0x2e8] sm:$0xff] %vm2808, %v2669
        %2903 = vst.msk [vmem:[%s300 + $0x2f0] sm:$0xff] %vm2808, %v2674
        %2904 = vst.msk [vmem:[%s300 + $0x2f8] sm:$0xff] %vm2808, %v2677
        %2905 = vst.msk [vmem:[%s300 + $0x300] sm:$0xff] %vm2808, %v2682
        %2906 = vst.msk [vmem:[%s300 + $0x308] sm:$0xff] %vm2808, %v2685
        %2907 = vst.msk [vmem:[%s300 + $0x310] sm:$0xff] %vm2808, %v2690
        %2908 = vst.msk [vmem:[%s300 + $0x318] sm:$0xff] %vm2808, %v2693
        %2909 = vst.msk [vmem:[%s300 + $0x320] sm:$0xff] %vm2808, %v2698
        %2910 = vst.msk [vmem:[%s300 + $0x328] sm:$0xff] %vm2808, %v2701
        %2911 = vst.msk [vmem:[%s300 + $0x330] sm:$0xff] %vm2808, %v2706
        %2912 = vst.msk [vmem:[%s300 + $0x338] sm:$0xff] %vm2808, %v2709
        %2913 = vst.msk [vmem:[%s300 + $0x340] sm:$0xff] %vm2808, %v2714
        %2914 = vst.msk [vmem:[%s300 + $0x348] sm:$0xff] %vm2808, %v2717
        %2915 = vst.msk [vmem:[%s300 + $0x350] sm:$0xff] %vm2808, %v2722
        %2916 = vst.msk [vmem:[%s300 + $0x358] sm:$0xff] %vm2808, %v2725
        %2917 = vst.msk [vmem:[%s300 + $0x360] sm:$0xff] %vm2808, %v2730
        %2918 = vst.msk [vmem:[%s300 + $0x368] sm:$0xff] %vm2808, %v2733
        %2919 = vst.msk [vmem:[%s300 + $0x370] sm:$0xff] %vm2808, %v2738
        %2920 = vst.msk [vmem:[%s300 + $0x378] sm:$0xff] %vm2808, %v2741
        %2921 = vst.msk [vmem:[%s300 + $0x380] sm:$0xff] %vm2808, %v2746
        %2922 = vst.msk [vmem:[%s300 + $0x388] sm:$0xff] %vm2808, %v2749
        %2923 = vst.msk [vmem:[%s300 + $0x390] sm:$0xff] %vm2808, %v2754
        %2924 = vst.msk [vmem:[%s300 + $0x398] sm:$0xff] %vm2808, %v2757
        %2925 = vst.msk [vmem:[%s300 + $0x3a0] sm:$0xff] %vm2808, %v2762
        %2926 = vst.msk [vmem:[%s300 + $0x3a8] sm:$0xff] %vm2808, %v2765
        %2927 = vst.msk [vmem:[%s300 + $0x3b0] sm:$0xff] %vm2808, %v2770
        %2928 = vst.msk [vmem:[%s300 + $0x3b8] sm:$0xff] %vm2808, %v2773
        %2929 = vst.msk [vmem:[%s300 + $0x3c0] sm:$0xff] %vm2808, %v2778
        %2930 = vst.msk [vmem:[%s300 + $0x3c8] sm:$0xff] %vm2808, %v2781
        %2931 = vst.msk [vmem:[%s300 + $0x3d0] sm:$0xff] %vm2808, %v2786
        %2932 = vst.msk [vmem:[%s300 + $0x3d8] sm:$0xff] %vm2808, %v2789
        %2933 = vst.msk [vmem:[%s300 + $0x3e0] sm:$0xff] %vm2808, %v2794
        %2934 = vst.msk [vmem:[%s300 + $0x3e8] sm:$0xff] %vm2808, %v2797
        %2935 = vst.msk [vmem:[%s300 + $0x3f0] sm:$0xff] %vm2808, %v2802
        %2936 = vst.msk [vmem:[%s300 + $0x3f8] sm:$0xff] %vm2808, %v2805
        %s2937 = smul.u32 128, %s22
        %p2938 = scmp.lt.s32.totalorder %s2937, 255
        %s2939 = scalar_select %p2938, %s2937, 255
        %s2940 = smul.addr %s2939, 8
        %s2941 = scalar_lea.vmem %s5, %s2940
        // Predicated region
        $region53: #{tpu_custom_call.1} parent=39 // pred_check
          %p2942 = pneg %p155
        $region54: #{tpu_custom_call.1} parent=39 // pred_check_branch
          %2944 = sbr.rel (%p2942) target = $region56
        $region55: #{tpu_custom_call.1} parent=39 // pred_region
          %s2945 = smul.u32 128, %s22
        $region56: #{tpu_custom_call.1} parent=39 // pred_fallthru
          _
      $region40: #{tpu_custom_call.1} parent=5 // pred_fallthru
        _
      %p2946 = scmp.le.s32.totalorder 2, %s17
      // Predicated region
      $region57: #{tpu_custom_call.1} parent=5 // pred_check
        %p2947 = pneg %p2946
      $region58: #{tpu_custom_call.1} parent=5 // pred_check_branch
        %2949 = sbr.rel (%p2947) target = $region60
      $region59: #{tpu_custom_call.1} parent=5 // pred_region
        %s2950 = ssub.s32 %s17, 2
        // Predicated region
        $region61: #{tpu_custom_call.1} parent=59 // pred_check
          %p2951 = pneg %p161
        $region62: #{tpu_custom_call.1} parent=59 // pred_check_branch
          %2953 = sbr.rel (%p2951) target = $region64
        $region63: #{tpu_custom_call.1} parent=59 // pred_region
          %s2954 = smul.u32 128, %s23
          %p2955 = scmp.lt.s32.totalorder %s2954, 255
          %s2956 = scalar_select %p2955, %s2954, 255
          %s2957 = smul.addr %s2956, 8
          %s2958 = scalar_lea.vmem %s5, %s2957
        $region64: #{tpu_custom_call.1} parent=59 // pred_fallthru
          _
      $region60: #{tpu_custom_call.1} parent=5 // pred_fallthru
        _
    $region6: #{tpu_custom_call.1} parent=1 // loop_footer
      %s21 = sadd.s32 1, %s17
    $region7: #{tpu_custom_call.1} parent=1 // loop_footer_branch
      %16 = sbr.rel target = $region3
    $region8: #{tpu_custom_call.1} parent=1 // loop_exit
      _
    %2959 = vsyncpa [#allocation3], 1
    %s2960 = scalar_lea.sflag [#allocation3], 1
    %2961 = vsyncpa %s2960, 1
    %2962 = vsyncpa [#allocation5], 1
    %s2963 = scalar_lea.sflag [#allocation5], 1
    %2964 = vsyncpa %s2963, 1

</llo_original>
